<compile_context>
chip_gen: v7x
topology: tpu7x:2x2x1
jax: 0.10.0
libtpu: 0.0.40
codegen_flags: <defaults>
</compile_context>

<pallas_src>
import jax
import jax.numpy as jnp
from jax.experimental import pallas as pl
from jax.experimental.pallas import tpu as pltpu


# ----------------------------------------------------------------------------
# Fused kernel: (fused) x-projection + interleaved layer-1 / layer-2 recurrences.
# ----------------------------------------------------------------------------
def _conv_lstm_kernel(x_ref, wf_ref, bf_ref,
                      wh1_ref, wx2_ref, wh2_ref, b2_ref,
                      out_ref):
    # x_ref  : (T*Bp, chw)  bf16, time-major flattened frames (batch padded to Bp=8)
    # wf_ref : (chw, 4H)    bf16, backbone-projection fused into layer-1 x-weights
    # bf_ref : (1, 4H)      f32,  fused layer-1 bias
    # wh1/wx2/wh2 : (H, 4H) bf16  recurrent / layer-2 input weights
    # b2_ref : (1, 4H)      f32   layer-2 bias
    # out_ref: (Bp, H)      f32   final ht of layer 2
    Bp, H = out_ref.shape
    T = x_ref.shape[0] // Bp

    # ---- layer-1 x-projection, fully hoisted: ONE lane-dense matmul (f32 accumulate) ----
    zx1 = jnp.dot(x_ref[...], wf_ref[...],
                  preferred_element_type=jnp.float32) + bf_ref[...]        # (T*Bp, 4H) f32

    wh1 = wh1_ref[...]
    wx2 = wx2_ref[...]
    wh2 = wh2_ref[...]
    b2 = b2_ref[...]

    def cell(z, ct):
        # Activations on the full packed (Bp, 4H = 128-lane) tile, then lane slices.
        sig = jax.nn.sigmoid(z)
        th = jnp.tanh(z)
        s1 = sig[:, 0 * H:1 * H]
        s2 = sig[:, 1 * H:2 * H]
        s3 = sig[:, 2 * H:3 * H]
        g = th[:, 3 * H:4 * H]
        c_next = s1 * ct + s2 * g
        # NOTE: intentionally uses the PRE-update cell state (matches PyTorch ref).
        h_next = jnp.tanh(ct) * s3
        return c_next, h_next

    # ---- interleaved layer-1 / layer-2 recurrences: two independent serial chains
    #      per iteration; only the tiny ht @ Wh dots remain on the critical path. ----
    ct1 = jnp.zeros((Bp, H), jnp.float32)
    ht1 = jnp.zeros((Bp, H), jnp.float32)
    ct2 = jnp.zeros((Bp, H), jnp.float32)
    ht2 = jnp.zeros((Bp, H), jnp.float32)
    for t in range(T):  # T is small & static -> fully unrolled straight-line code
        z1 = jnp.dot(ht1.astype(wh1.dtype), wh1,
                     preferred_element_type=jnp.float32) + zx1[t * Bp:(t + 1) * Bp, :]
        ct1, ht1 = cell(z1, ct1)
        z2 = (jnp.dot(ht2.astype(wh2.dtype), wh2,
                      preferred_element_type=jnp.float32)
              + jnp.dot(ht1.astype(wx2.dtype), wx2,
                        preferred_element_type=jnp.float32)
              + b2)
        ct2, ht2 = cell(z2, ct2)

    out_ref[...] = ht2


def conv_lstm_forward(Seq, proj_w, proj_b, p1, p2, hidden):
    """Seq: (B, T, C, H, W) float32 -> final ht of layer 2: (B, hidden)."""
    B, T, C, HH, WW = Seq.shape
    chw = C * HH * WW

    wx1, wh1, b1 = p1
    wx2, wh2, b2 = p2

    # Fold the backbone stand-in projection into the layer-1 x weights (f32 precompute).
    Wfused = proj_w @ wx1                       # (chw, 4H)
    bfused = proj_b @ wx1 + b1                  # (4H,)

    # Pad batch to a full sublane (8); padded rows are dead work sliced off below.
    Bp = max(8, ((B + 7) // 8) * 8)
    Seq_p = jnp.pad(Seq, ((0, Bp - B), (0, 0), (0, 0), (0, 0), (0, 0)))
    x_tm = Seq_p.transpose(1, 0, 2, 3, 4).reshape(T * Bp, chw)   # time-major (t, b) rows

    # bf16 MXU operands; accumulation and gate/cell math stay f32 inside the kernel.
    x_bf = x_tm.astype(jnp.bfloat16)
    wf_bf = Wfused.astype(jnp.bfloat16)
    wh1_bf = wh1.astype(jnp.bfloat16)
    wx2_bf = wx2.astype(jnp.bfloat16)
    wh2_bf = wh2.astype(jnp.bfloat16)

    out = pl.pallas_call(
        _conv_lstm_kernel,
        out_shape=jax.ShapeDtypeStruct((Bp, hidden), jnp.float32),
        grid_spec=pltpu.PrefetchScalarGridSpec(
            num_scalar_prefetch=0,
            grid=(1,),
            in_specs=[
                pl.BlockSpec((T * Bp, chw), lambda i: (0, 0)),          # x (bf16)
                pl.BlockSpec((chw, 4 * hidden), lambda i: (0, 0)),      # Wfused (bf16)
                pl.BlockSpec((1, 4 * hidden), lambda i: (0, 0)),        # bfused (f32)
                pl.BlockSpec((hidden, 4 * hidden), lambda i: (0, 0)),   # wh1 (bf16)
                pl.BlockSpec((hidden, 4 * hidden), lambda i: (0, 0)),   # wx2 (bf16)
                pl.BlockSpec((hidden, 4 * hidden), lambda i: (0, 0)),   # wh2 (bf16)
                pl.BlockSpec((1, 4 * hidden), lambda i: (0, 0)),        # b2 (f32)
            ],
            out_specs=pl.BlockSpec((Bp, hidden), lambda i: (0, 0)),
        ),
        compiler_params=pltpu.CompilerParams(
            dimension_semantics=("arbitrary",),
            vmem_limit_bytes=32 * 1024 * 1024,
        ),
    )(x_bf, wf_bf, bfused.reshape(1, 4 * hidden),
      wh1_bf, wx2_bf, wh2_bf, b2.reshape(1, 4 * hidden))
    return out[:B]


# ----------------------------------------------------------------------------
# Parameter construction (deterministic), matching nn.Linear(input+hidden, hidden)
# for Linear1..Linear4, with Input1 = cat((ht, x), -1) -> first H input cols are ht.
# ----------------------------------------------------------------------------
def make_cell_params(key, input_fea, hidden):
    ks = jax.random.split(key, 8)
    ws = [0.1 * jax.random.normal(ks[j], (hidden, input_fea + hidden), jnp.float32)
          for j in range(4)]
    bs = [0.1 * jax.random.normal(ks[4 + j], (hidden,), jnp.float32) for j in range(4)]
    # PyTorch Linear computes Input1 @ W.T + b ; split W into ht-part and x-part.
    wh = jnp.concatenate([w[:, :hidden].T for w in ws], axis=1)       # (H, 4H)
    wx = jnp.concatenate([w[:, hidden:].T for w in ws], axis=1)       # (F, 4H)
    b = jnp.concatenate(bs, axis=0)                                   # (4H,)
    return wx, wh, b


def conv_lstm_reference(feats_TBF, p1, p2, hidden):
    """Pure-JAX f32 reference of the two-layer recurrence (for sanity checking)."""
    def cell(x, ct, ht, wx, wh, b):
        z = ht @ wh + x @ wx + b
        H = hidden
        s1 = jax.nn.sigmoid(z[:, :H])
        s2 = jax.nn.sigmoid(z[:, H:2 * H])
        s3 = jax.nn.sigmoid(z[:, 2 * H:3 * H])
        g = jnp.tanh(z[:, 3 * H:])
        return s1 * ct + s2 * g, jnp.tanh(ct) * s3

    T, B, _ = feats_TBF.shape
    ct = jnp.zeros((B, hidden)); ht = jnp.zeros((B, hidden))
    seq = []
    for t in range(T):
        ct, ht = cell(feats_TBF[t], ct, ht, *p1)
        seq.append(ht)
    ct2 = jnp.zeros((B, hidden)); ht2 = jnp.zeros((B, hidden))
    for t in range(T):
        ct2, ht2 = cell(seq[t], ct2, ht2, *p2)
    return ht2


if __name__ == "__main__":
    B, T, C, HH, WW = 2, 8, 4, 16, 16
    input_fea = 32     # stand-in backbone feature dim
    hidden = 32

    key = jax.random.PRNGKey(0)
    k_x, k_pw, k_pb, k_c1, k_c2 = jax.random.split(key, 5)

    Seq = jax.random.normal(k_x, (B, T, C, HH, WW), jnp.float32)

    # Stand-in feature extractor parameters.
    chw = C * HH * WW
    proj_w = 0.05 * jax.random.normal(k_pw, (chw, input_fea), jnp.float32)
    proj_b = 0.05 * jax.random.normal(k_pb, (input_fea,), jnp.float32)

    # LSTM cell parameters (Linear1..Linear4 packed; Linear5 unused in forward).
    p1 = make_cell_params(k_c1, input_fea, hidden)
    p2 = make_cell_params(k_c2, hidden, hidden)

    # --- fused Pallas forward: fused projection + interleaved cell1/cell2 recurrence ---
    ht_final = conv_lstm_forward(Seq, proj_w, proj_b, p1, p2, hidden)
    ht_final = jax.block_until_ready(ht_final)

    # sanity check against a pure-JAX f32 reference of the same math
    x_flat = Seq.reshape(B * T, chw)
    feats = x_flat @ proj_w + proj_b
    feats_TBF = feats.reshape(B, T, input_fea).transpose(1, 0, 2)    # (T, B, F)
    ref = conv_lstm_reference(feats_TBF, p1, p2, hidden)

    assert ht_final.shape == (B, hidden)
    # bf16 matmul operands (f32 accumulate) -> tolerance loosened vs the pure-f32 ref.
    max_err = float(jnp.max(jnp.abs(ht_final - ref)))
    assert jnp.allclose(ht_final, ref, atol=5e-2, rtol=5e-2), max_err

    print("KERNEL_OK")
</pallas_src>

<mosaic_0001>
module attributes {stable_mosaic.version = 11 : i64} {
  func.func @_conv_lstm_kernel(%arg0: i32, %arg1: memref<64x1024xbf16, #tpu.memory_space<vmem>>, %arg2: memref<1024x128xbf16, #tpu.memory_space<vmem>>, %arg3: memref<1x128xf32, #tpu.memory_space<vmem>>, %arg4: memref<32x128xbf16, #tpu.memory_space<vmem>>, %arg5: memref<32x128xbf16, #tpu.memory_space<vmem>>, %arg6: memref<32x128xbf16, #tpu.memory_space<vmem>>, %arg7: memref<1x128xf32, #tpu.memory_space<vmem>>, %arg8: memref<8x32xf32, #tpu.memory_space<vmem>>) attributes {dimension_semantics = [#tpu.dimension_semantics<arbitrary>], iteration_bounds = array<i64: 1>, scalar_prefetch = 0 : i64, scratch_operands = 0 : i64, tpu.core_type = #tpu.core_type<tc>, window_params = [{pipeline_mode = #tpu.pipeline_mode<synchronous>, transform_indices = @transform_0, window_bounds = array<i64: 64, 1024>}, {pipeline_mode = #tpu.pipeline_mode<synchronous>, transform_indices = @transform_1, window_bounds = array<i64: 1024, 128>}, {pipeline_mode = #tpu.pipeline_mode<synchronous>, transform_indices = @transform_2, window_bounds = array<i64: 1, 128>}, {pipeline_mode = #tpu.pipeline_mode<synchronous>, transform_indices = @transform_3, window_bounds = array<i64: 32, 128>}, {pipeline_mode = #tpu.pipeline_mode<synchronous>, transform_indices = @transform_4, window_bounds = array<i64: 32, 128>}, {pipeline_mode = #tpu.pipeline_mode<synchronous>, transform_indices = @transform_5, window_bounds = array<i64: 32, 128>}, {pipeline_mode = #tpu.pipeline_mode<synchronous>, transform_indices = @transform_6, window_bounds = array<i64: 1, 128>}, {pipeline_mode = #tpu.pipeline_mode<synchronous>, transform_indices = @transform_7, window_bounds = array<i64: 8, 32>}]} {
    %c0 = arith.constant 0 : index
    %c0_0 = arith.constant 0 : index
    %0 = vector.load %arg1[%c0, %c0_0] : memref<64x1024xbf16, #tpu.memory_space<vmem>>, vector<64x1024xbf16>
    %c0_1 = arith.constant 0 : index
    %c0_2 = arith.constant 0 : index
    %1 = vector.load %arg2[%c0_1, %c0_2] : memref<1024x128xbf16, #tpu.memory_space<vmem>>, vector<1024x128xbf16>
    %cst = arith.constant dense<0.000000e+00> : vector<64x128xf32>
    %2 = tpu.matmul %0, %1, %cst {dimension_numbers = #tpu.dot_dimension_numbers<[1], [0], [0], [1], [0, 0, 1, 1], [], []>} : vector<64x1024xbf16>, vector<1024x128xbf16>, vector<64x128xf32> -> vector<64x128xf32>
    %c0_3 = arith.constant 0 : index
    %c0_4 = arith.constant 0 : index
    %3 = vector.load %arg3[%c0_3, %c0_4] : memref<1x128xf32, #tpu.memory_space<vmem>>, vector<1x128xf32>
    %4 = vector.broadcast %3 : vector<1x128xf32> to vector<64x128xf32>
    %5 = arith.addf %2, %4 : vector<64x128xf32>
    %c0_5 = arith.constant 0 : index
    %c0_6 = arith.constant 0 : index
    %6 = vector.load %arg4[%c0_5, %c0_6] : memref<32x128xbf16, #tpu.memory_space<vmem>>, vector<32x128xbf16>
    %c0_7 = arith.constant 0 : index
    %c0_8 = arith.constant 0 : index
    %7 = vector.load %arg5[%c0_7, %c0_8] : memref<32x128xbf16, #tpu.memory_space<vmem>>, vector<32x128xbf16>
    %c0_9 = arith.constant 0 : index
    %c0_10 = arith.constant 0 : index
    %8 = vector.load %arg6[%c0_9, %c0_10] : memref<32x128xbf16, #tpu.memory_space<vmem>>, vector<32x128xbf16>
    %c0_11 = arith.constant 0 : index
    %c0_12 = arith.constant 0 : index
    %9 = vector.load %arg7[%c0_11, %c0_12] : memref<1x128xf32, #tpu.memory_space<vmem>>, vector<1x128xf32>
    %cst_13 = arith.constant 0.000000e+00 : f32
    %10 = vector.broadcast %cst_13 : f32 to vector<8x32xf32>
    %cst_14 = arith.constant 0.000000e+00 : f32
    %11 = vector.broadcast %cst_14 : f32 to vector<8x32xf32>
    %cst_15 = arith.constant 0.000000e+00 : f32
    %12 = vector.broadcast %cst_15 : f32 to vector<8x32xf32>
    %cst_16 = arith.constant 0.000000e+00 : f32
    %13 = vector.broadcast %cst_16 : f32 to vector<8x32xf32>
    %14 = arith.truncf %11 : vector<8x32xf32> to vector<8x32xbf16>
    %cst_17 = arith.constant dense<0.000000e+00> : vector<8x128xf32>
    %15 = tpu.matmul %14, %6, %cst_17 {dimension_numbers = #tpu.dot_dimension_numbers<[1], [0], [0], [1], [0, 0, 1, 1], [], []>} : vector<8x32xbf16>, vector<32x128xbf16>, vector<8x128xf32> -> vector<8x128xf32>
    %16 = vector.extract_strided_slice %5 {offsets = [0, 0], sizes = [8, 128], strides = [1, 1]} : vector<64x128xf32> to vector<8x128xf32>
    %17 = arith.addf %15, %16 : vector<8x128xf32>
    %18 = arith.negf %17 : vector<8x128xf32>
    %19 = math.exp %18 : vector<8x128xf32>
    %cst_18 = arith.constant 1.000000e+00 : f32
    %20 = vector.broadcast %cst_18 : f32 to vector<8x128xf32>
    %21 = arith.addf %20, %19 : vector<8x128xf32>
    %22 = arith.divf %20, %21 : vector<8x128xf32>
    %23 = math.tanh %17 : vector<8x128xf32>
    %24 = vector.extract_strided_slice %22 {offsets = [0, 0], sizes = [8, 32], strides = [1, 1]} : vector<8x128xf32> to vector<8x32xf32>
    %25 = vector.extract_strided_slice %22 {offsets = [0, 32], sizes = [8, 32], strides = [1, 1]} : vector<8x128xf32> to vector<8x32xf32>
    %26 = vector.extract_strided_slice %22 {offsets = [0, 64], sizes = [8, 32], strides = [1, 1]} : vector<8x128xf32> to vector<8x32xf32>
    %27 = vector.extract_strided_slice %23 {offsets = [0, 96], sizes = [8, 32], strides = [1, 1]} : vector<8x128xf32> to vector<8x32xf32>
    %28 = arith.mulf %24, %10 : vector<8x32xf32>
    %29 = arith.mulf %25, %27 : vector<8x32xf32>
    %30 = arith.addf %28, %29 : vector<8x32xf32>
    %31 = math.tanh %10 : vector<8x32xf32>
    %32 = arith.mulf %31, %26 : vector<8x32xf32>
    %33 = arith.truncf %13 : vector<8x32xf32> to vector<8x32xbf16>
    %cst_19 = arith.constant dense<0.000000e+00> : vector<8x128xf32>
    %34 = tpu.matmul %33, %8, %cst_19 {dimension_numbers = #tpu.dot_dimension_numbers<[1], [0], [0], [1], [0, 0, 1, 1], [], []>} : vector<8x32xbf16>, vector<32x128xbf16>, vector<8x128xf32> -> vector<8x128xf32>
    %35 = arith.truncf %32 : vector<8x32xf32> to vector<8x32xbf16>
    %cst_20 = arith.constant dense<0.000000e+00> : vector<8x128xf32>
    %36 = tpu.matmul %35, %7, %cst_20 {dimension_numbers = #tpu.dot_dimension_numbers<[1], [0], [0], [1], [0, 0, 1, 1], [], []>} : vector<8x32xbf16>, vector<32x128xbf16>, vector<8x128xf32> -> vector<8x128xf32>
    %37 = arith.addf %34, %36 : vector<8x128xf32>
    %38 = vector.broadcast %9 : vector<1x128xf32> to vector<8x128xf32>
    %39 = arith.addf %37, %38 : vector<8x128xf32>
    %40 = arith.negf %39 : vector<8x128xf32>
    %41 = math.exp %40 : vector<8x128xf32>
    %cst_21 = arith.constant 1.000000e+00 : f32
    %42 = vector.broadcast %cst_21 : f32 to vector<8x128xf32>
    %43 = arith.addf %42, %41 : vector<8x128xf32>
    %44 = arith.divf %42, %43 : vector<8x128xf32>
    %45 = math.tanh %39 : vector<8x128xf32>
    %46 = vector.extract_strided_slice %44 {offsets = [0, 0], sizes = [8, 32], strides = [1, 1]} : vector<8x128xf32> to vector<8x32xf32>
    %47 = vector.extract_strided_slice %44 {offsets = [0, 32], sizes = [8, 32], strides = [1, 1]} : vector<8x128xf32> to vector<8x32xf32>
    %48 = vector.extract_strided_slice %44 {offsets = [0, 64], sizes = [8, 32], strides = [1, 1]} : vector<8x128xf32> to vector<8x32xf32>
    %49 = vector.extract_strided_slice %45 {offsets = [0, 96], sizes = [8, 32], strides = [1, 1]} : vector<8x128xf32> to vector<8x32xf32>
    %50 = arith.mulf %46, %12 : vector<8x32xf32>
    %51 = arith.mulf %47, %49 : vector<8x32xf32>
    %52 = arith.addf %50, %51 : vector<8x32xf32>
    %53 = math.tanh %12 : vector<8x32xf32>
    %54 = arith.mulf %53, %48 : vector<8x32xf32>
    %55 = arith.truncf %32 : vector<8x32xf32> to vector<8x32xbf16>
    %cst_22 = arith.constant dense<0.000000e+00> : vector<8x128xf32>
    %56 = tpu.matmul %55, %6, %cst_22 {dimension_numbers = #tpu.dot_dimension_numbers<[1], [0], [0], [1], [0, 0, 1, 1], [], []>} : vector<8x32xbf16>, vector<32x128xbf16>, vector<8x128xf32> -> vector<8x128xf32>
    %57 = vector.extract_strided_slice %5 {offsets = [8, 0], sizes = [8, 128], strides = [1, 1]} : vector<64x128xf32> to vector<8x128xf32>
    %58 = arith.addf %56, %57 : vector<8x128xf32>
    %59 = arith.negf %58 : vector<8x128xf32>
    %60 = math.exp %59 : vector<8x128xf32>
    %cst_23 = arith.constant 1.000000e+00 : f32
    %61 = vector.broadcast %cst_23 : f32 to vector<8x128xf32>
    %62 = arith.addf %61, %60 : vector<8x128xf32>
    %63 = arith.divf %61, %62 : vector<8x128xf32>
    %64 = math.tanh %58 : vector<8x128xf32>
    %65 = vector.extract_strided_slice %63 {offsets = [0, 0], sizes = [8, 32], strides = [1, 1]} : vector<8x128xf32> to vector<8x32xf32>
    %66 = vector.extract_strided_slice %63 {offsets = [0, 32], sizes = [8, 32], strides = [1, 1]} : vector<8x128xf32> to vector<8x32xf32>
    %67 = vector.extract_strided_slice %63 {offsets = [0, 64], sizes = [8, 32], strides = [1, 1]} : vector<8x128xf32> to vector<8x32xf32>
    %68 = vector.extract_strided_slice %64 {offsets = [0, 96], sizes = [8, 32], strides = [1, 1]} : vector<8x128xf32> to vector<8x32xf32>
    %69 = arith.mulf %65, %30 : vector<8x32xf32>
    %70 = arith.mulf %66, %68 : vector<8x32xf32>
    %71 = arith.addf %69, %70 : vector<8x32xf32>
    %72 = math.tanh %30 : vector<8x32xf32>
    %73 = arith.mulf %72, %67 : vector<8x32xf32>
    %74 = arith.truncf %54 : vector<8x32xf32> to vector<8x32xbf16>
    %cst_24 = arith.constant dense<0.000000e+00> : vector<8x128xf32>
    %75 = tpu.matmul %74, %8, %cst_24 {dimension_numbers = #tpu.dot_dimension_numbers<[1], [0], [0], [1], [0, 0, 1, 1], [], []>} : vector<8x32xbf16>, vector<32x128xbf16>, vector<8x128xf32> -> vector<8x128xf32>
    %76 = arith.truncf %73 : vector<8x32xf32> to vector<8x32xbf16>
    %cst_25 = arith.constant dense<0.000000e+00> : vector<8x128xf32>
    %77 = tpu.matmul %76, %7, %cst_25 {dimension_numbers = #tpu.dot_dimension_numbers<[1], [0], [0], [1], [0, 0, 1, 1], [], []>} : vector<8x32xbf16>, vector<32x128xbf16>, vector<8x128xf32> -> vector<8x128xf32>
    %78 = arith.addf %75, %77 : vector<8x128xf32>
    %79 = vector.broadcast %9 : vector<1x128xf32> to vector<8x128xf32>
    %80 = arith.addf %78, %79 : vector<8x128xf32>
    %81 = arith.negf %80 : vector<8x128xf32>
    %82 = math.exp %81 : vector<8x128xf32>
    %cst_26 = arith.constant 1.000000e+00 : f32
    %83 = vector.broadcast %cst_26 : f32 to vector<8x128xf32>
    %84 = arith.addf %83, %82 : vector<8x128xf32>
    %85 = arith.divf %83, %84 : vector<8x128xf32>
    %86 = math.tanh %80 : vector<8x128xf32>
    %87 = vector.extract_strided_slice %85 {offsets = [0, 0], sizes = [8, 32], strides = [1, 1]} : vector<8x128xf32> to vector<8x32xf32>
    %88 = vector.extract_strided_slice %85 {offsets = [0, 32], sizes = [8, 32], strides = [1, 1]} : vector<8x128xf32> to vector<8x32xf32>
    %89 = vector.extract_strided_slice %85 {offsets = [0, 64], sizes = [8, 32], strides = [1, 1]} : vector<8x128xf32> to vector<8x32xf32>
    %90 = vector.extract_strided_slice %86 {offsets = [0, 96], sizes = [8, 32], strides = [1, 1]} : vector<8x128xf32> to vector<8x32xf32>
    %91 = arith.mulf %87, %52 : vector<8x32xf32>
    %92 = arith.mulf %88, %90 : vector<8x32xf32>
    %93 = arith.addf %91, %92 : vector<8x32xf32>
    %94 = math.tanh %52 : vector<8x32xf32>
    %95 = arith.mulf %94, %89 : vector<8x32xf32>
    %96 = arith.truncf %73 : vector<8x32xf32> to vector<8x32xbf16>
    %cst_27 = arith.constant dense<0.000000e+00> : vector<8x128xf32>
    %97 = tpu.matmul %96, %6, %cst_27 {dimension_numbers = #tpu.dot_dimension_numbers<[1], [0], [0], [1], [0, 0, 1, 1], [], []>} : vector<8x32xbf16>, vector<32x128xbf16>, vector<8x128xf32> -> vector<8x128xf32>
    %98 = vector.extract_strided_slice %5 {offsets = [16, 0], sizes = [8, 128], strides = [1, 1]} : vector<64x128xf32> to vector<8x128xf32>
    %99 = arith.addf %97, %98 : vector<8x128xf32>
    %100 = arith.negf %99 : vector<8x128xf32>
    %101 = math.exp %100 : vector<8x128xf32>
    %cst_28 = arith.constant 1.000000e+00 : f32
    %102 = vector.broadcast %cst_28 : f32 to vector<8x128xf32>
    %103 = arith.addf %102, %101 : vector<8x128xf32>
    %104 = arith.divf %102, %103 : vector<8x128xf32>
    %105 = math.tanh %99 : vector<8x128xf32>
    %106 = vector.extract_strided_slice %104 {offsets = [0, 0], sizes = [8, 32], strides = [1, 1]} : vector<8x128xf32> to vector<8x32xf32>
    %107 = vector.extract_strided_slice %104 {offsets = [0, 32], sizes = [8, 32], strides = [1, 1]} : vector<8x128xf32> to vector<8x32xf32>
    %108 = vector.extract_strided_slice %104 {offsets = [0, 64], sizes = [8, 32], strides = [1, 1]} : vector<8x128xf32> to vector<8x32xf32>
    %109 = vector.extract_strided_slice %105 {offsets = [0, 96], sizes = [8, 32], strides = [1, 1]} : vector<8x128xf32> to vector<8x32xf32>
    %110 = arith.mulf %106, %71 : vector<8x32xf32>
    %111 = arith.mulf %107, %109 : vector<8x32xf32>
    %112 = arith.addf %110, %111 : vector<8x32xf32>
    %113 = math.tanh %71 : vector<8x32xf32>
    %114 = arith.mulf %113, %108 : vector<8x32xf32>
    %115 = arith.truncf %95 : vector<8x32xf32> to vector<8x32xbf16>
    %cst_29 = arith.constant dense<0.000000e+00> : vector<8x128xf32>
    %116 = tpu.matmul %115, %8, %cst_29 {dimension_numbers = #tpu.dot_dimension_numbers<[1], [0], [0], [1], [0, 0, 1, 1], [], []>} : vector<8x32xbf16>, vector<32x128xbf16>, vector<8x128xf32> -> vector<8x128xf32>
    %117 = arith.truncf %114 : vector<8x32xf32> to vector<8x32xbf16>
    %cst_30 = arith.constant dense<0.000000e+00> : vector<8x128xf32>
    %118 = tpu.matmul %117, %7, %cst_30 {dimension_numbers = #tpu.dot_dimension_numbers<[1], [0], [0], [1], [0, 0, 1, 1], [], []>} : vector<8x32xbf16>, vector<32x128xbf16>, vector<8x128xf32> -> vector<8x128xf32>
    %119 = arith.addf %116, %118 : vector<8x128xf32>
    %120 = vector.broadcast %9 : vector<1x128xf32> to vector<8x128xf32>
    %121 = arith.addf %119, %120 : vector<8x128xf32>
    %122 = arith.negf %121 : vector<8x128xf32>
    %123 = math.exp %122 : vector<8x128xf32>
    %cst_31 = arith.constant 1.000000e+00 : f32
    %124 = vector.broadcast %cst_31 : f32 to vector<8x128xf32>
    %125 = arith.addf %124, %123 : vector<8x128xf32>
    %126 = arith.divf %124, %125 : vector<8x128xf32>
    %127 = math.tanh %121 : vector<8x128xf32>
    %128 = vector.extract_strided_slice %126 {offsets = [0, 0], sizes = [8, 32], strides = [1, 1]} : vector<8x128xf32> to vector<8x32xf32>
    %129 = vector.extract_strided_slice %126 {offsets = [0, 32], sizes = [8, 32], strides = [1, 1]} : vector<8x128xf32> to vector<8x32xf32>
    %130 = vector.extract_strided_slice %126 {offsets = [0, 64], sizes = [8, 32], strides = [1, 1]} : vector<8x128xf32> to vector<8x32xf32>
    %131 = vector.extract_strided_slice %127 {offsets = [0, 96], sizes = [8, 32], strides = [1, 1]} : vector<8x128xf32> to vector<8x32xf32>
    %132 = arith.mulf %128, %93 : vector<8x32xf32>
    %133 = arith.mulf %129, %131 : vector<8x32xf32>
    %134 = arith.addf %132, %133 : vector<8x32xf32>
    %135 = math.tanh %93 : vector<8x32xf32>
    %136 = arith.mulf %135, %130 : vector<8x32xf32>
    %137 = arith.truncf %114 : vector<8x32xf32> to vector<8x32xbf16>
    %cst_32 = arith.constant dense<0.000000e+00> : vector<8x128xf32>
    %138 = tpu.matmul %137, %6, %cst_32 {dimension_numbers = #tpu.dot_dimension_numbers<[1], [0], [0], [1], [0, 0, 1, 1], [], []>} : vector<8x32xbf16>, vector<32x128xbf16>, vector<8x128xf32> -> vector<8x128xf32>
    %139 = vector.extract_strided_slice %5 {offsets = [24, 0], sizes = [8, 128], strides = [1, 1]} : vector<64x128xf32> to vector<8x128xf32>
    %140 = arith.addf %138, %139 : vector<8x128xf32>
    %141 = arith.negf %140 : vector<8x128xf32>
    %142 = math.exp %141 : vector<8x128xf32>
    %cst_33 = arith.constant 1.000000e+00 : f32
    %143 = vector.broadcast %cst_33 : f32 to vector<8x128xf32>
    %144 = arith.addf %143, %142 : vector<8x128xf32>
    %145 = arith.divf %143, %144 : vector<8x128xf32>
    %146 = math.tanh %140 : vector<8x128xf32>
    %147 = vector.extract_strided_slice %145 {offsets = [0, 0], sizes = [8, 32], strides = [1, 1]} : vector<8x128xf32> to vector<8x32xf32>
    %148 = vector.extract_strided_slice %145 {offsets = [0, 32], sizes = [8, 32], strides = [1, 1]} : vector<8x128xf32> to vector<8x32xf32>
    %149 = vector.extract_strided_slice %145 {offsets = [0, 64], sizes = [8, 32], strides = [1, 1]} : vector<8x128xf32> to vector<8x32xf32>
    %150 = vector.extract_strided_slice %146 {offsets = [0, 96], sizes = [8, 32], strides = [1, 1]} : vector<8x128xf32> to vector<8x32xf32>
    %151 = arith.mulf %147, %112 : vector<8x32xf32>
    %152 = arith.mulf %148, %150 : vector<8x32xf32>
    %153 = arith.addf %151, %152 : vector<8x32xf32>
    %154 = math.tanh %112 : vector<8x32xf32>
    %155 = arith.mulf %154, %149 : vector<8x32xf32>
    %156 = arith.truncf %136 : vector<8x32xf32> to vector<8x32xbf16>
    %cst_34 = arith.constant dense<0.000000e+00> : vector<8x128xf32>
    %157 = tpu.matmul %156, %8, %cst_34 {dimension_numbers = #tpu.dot_dimension_numbers<[1], [0], [0], [1], [0, 0, 1, 1], [], []>} : vector<8x32xbf16>, vector<32x128xbf16>, vector<8x128xf32> -> vector<8x128xf32>
    %158 = arith.truncf %155 : vector<8x32xf32> to vector<8x32xbf16>
    %cst_35 = arith.constant dense<0.000000e+00> : vector<8x128xf32>
    %159 = tpu.matmul %158, %7, %cst_35 {dimension_numbers = #tpu.dot_dimension_numbers<[1], [0], [0], [1], [0, 0, 1, 1], [], []>} : vector<8x32xbf16>, vector<32x128xbf16>, vector<8x128xf32> -> vector<8x128xf32>
    %160 = arith.addf %157, %159 : vector<8x128xf32>
    %161 = vector.broadcast %9 : vector<1x128xf32> to vector<8x128xf32>
    %162 = arith.addf %160, %161 : vector<8x128xf32>
    %163 = arith.negf %162 : vector<8x128xf32>
    %164 = math.exp %163 : vector<8x128xf32>
    %cst_36 = arith.constant 1.000000e+00 : f32
    %165 = vector.broadcast %cst_36 : f32 to vector<8x128xf32>
    %166 = arith.addf %165, %164 : vector<8x128xf32>
    %167 = arith.divf %165, %166 : vector<8x128xf32>
    %168 = math.tanh %162 : vector<8x128xf32>
    %169 = vector.extract_strided_slice %167 {offsets = [0, 0], sizes = [8, 32], strides = [1, 1]} : vector<8x128xf32> to vector<8x32xf32>
    %170 = vector.extract_strided_slice %167 {offsets = [0, 32], sizes = [8, 32], strides = [1, 1]} : vector<8x128xf32> to vector<8x32xf32>
    %171 = vector.extract_strided_slice %167 {offsets = [0, 64], sizes = [8, 32], strides = [1, 1]} : vector<8x128xf32> to vector<8x32xf32>
    %172 = vector.extract_strided_slice %168 {offsets = [0, 96], sizes = [8, 32], strides = [1, 1]} : vector<8x128xf32> to vector<8x32xf32>
    %173 = arith.mulf %169, %134 : vector<8x32xf32>
    %174 = arith.mulf %170, %172 : vector<8x32xf32>
    %175 = arith.addf %173, %174 : vector<8x32xf32>
    %176 = math.tanh %134 : vector<8x32xf32>
    %177 = arith.mulf %176, %171 : vector<8x32xf32>
    %178 = arith.truncf %155 : vector<8x32xf32> to vector<8x32xbf16>
    %cst_37 = arith.constant dense<0.000000e+00> : vector<8x128xf32>
    %179 = tpu.matmul %178, %6, %cst_37 {dimension_numbers = #tpu.dot_dimension_numbers<[1], [0], [0], [1], [0, 0, 1, 1], [], []>} : vector<8x32xbf16>, vector<32x128xbf16>, vector<8x128xf32> -> vector<8x128xf32>
    %180 = vector.extract_strided_slice %5 {offsets = [32, 0], sizes = [8, 128], strides = [1, 1]} : vector<64x128xf32> to vector<8x128xf32>
    %181 = arith.addf %179, %180 : vector<8x128xf32>
    %182 = arith.negf %181 : vector<8x128xf32>
    %183 = math.exp %182 : vector<8x128xf32>
    %cst_38 = arith.constant 1.000000e+00 : f32
    %184 = vector.broadcast %cst_38 : f32 to vector<8x128xf32>
    %185 = arith.addf %184, %183 : vector<8x128xf32>
    %186 = arith.divf %184, %185 : vector<8x128xf32>
    %187 = math.tanh %181 : vector<8x128xf32>
    %188 = vector.extract_strided_slice %186 {offsets = [0, 0], sizes = [8, 32], strides = [1, 1]} : vector<8x128xf32> to vector<8x32xf32>
    %189 = vector.extract_strided_slice %186 {offsets = [0, 32], sizes = [8, 32], strides = [1, 1]} : vector<8x128xf32> to vector<8x32xf32>
    %190 = vector.extract_strided_slice %186 {offsets = [0, 64], sizes = [8, 32], strides = [1, 1]} : vector<8x128xf32> to vector<8x32xf32>
    %191 = vector.extract_strided_slice %187 {offsets = [0, 96], sizes = [8, 32], strides = [1, 1]} : vector<8x128xf32> to vector<8x32xf32>
    %192 = arith.mulf %188, %153 : vector<8x32xf32>
    %193 = arith.mulf %189, %191 : vector<8x32xf32>
    %194 = arith.addf %192, %193 : vector<8x32xf32>
    %195 = math.tanh %153 : vector<8x32xf32>
    %196 = arith.mulf %195, %190 : vector<8x32xf32>
    %197 = arith.truncf %177 : vector<8x32xf32> to vector<8x32xbf16>
    %cst_39 = arith.constant dense<0.000000e+00> : vector<8x128xf32>
    %198 = tpu.matmul %197, %8, %cst_39 {dimension_numbers = #tpu.dot_dimension_numbers<[1], [0], [0], [1], [0, 0, 1, 1], [], []>} : vector<8x32xbf16>, vector<32x128xbf16>, vector<8x128xf32> -> vector<8x128xf32>
    %199 = arith.truncf %196 : vector<8x32xf32> to vector<8x32xbf16>
    %cst_40 = arith.constant dense<0.000000e+00> : vector<8x128xf32>
    %200 = tpu.matmul %199, %7, %cst_40 {dimension_numbers = #tpu.dot_dimension_numbers<[1], [0], [0], [1], [0, 0, 1, 1], [], []>} : vector<8x32xbf16>, vector<32x128xbf16>, vector<8x128xf32> -> vector<8x128xf32>
    %201 = arith.addf %198, %200 : vector<8x128xf32>
    %202 = vector.broadcast %9 : vector<1x128xf32> to vector<8x128xf32>
    %203 = arith.addf %201, %202 : vector<8x128xf32>
    %204 = arith.negf %203 : vector<8x128xf32>
    %205 = math.exp %204 : vector<8x128xf32>
    %cst_41 = arith.constant 1.000000e+00 : f32
    %206 = vector.broadcast %cst_41 : f32 to vector<8x128xf32>
    %207 = arith.addf %206, %205 : vector<8x128xf32>
    %208 = arith.divf %206, %207 : vector<8x128xf32>
    %209 = math.tanh %203 : vector<8x128xf32>
    %210 = vector.extract_strided_slice %208 {offsets = [0, 0], sizes = [8, 32], strides = [1, 1]} : vector<8x128xf32> to vector<8x32xf32>
    %211 = vector.extract_strided_slice %208 {offsets = [0, 32], sizes = [8, 32], strides = [1, 1]} : vector<8x128xf32> to vector<8x32xf32>
    %212 = vector.extract_strided_slice %208 {offsets = [0, 64], sizes = [8, 32], strides = [1, 1]} : vector<8x128xf32> to vector<8x32xf32>
    %213 = vector.extract_strided_slice %209 {offsets = [0, 96], sizes = [8, 32], strides = [1, 1]} : vector<8x128xf32> to vector<8x32xf32>
    %214 = arith.mulf %210, %175 : vector<8x32xf32>
    %215 = arith.mulf %211, %213 : vector<8x32xf32>
    %216 = arith.addf %214, %215 : vector<8x32xf32>
    %217 = math.tanh %175 : vector<8x32xf32>
    %218 = arith.mulf %217, %212 : vector<8x32xf32>
    %219 = arith.truncf %196 : vector<8x32xf32> to vector<8x32xbf16>
    %cst_42 = arith.constant dense<0.000000e+00> : vector<8x128xf32>
    %220 = tpu.matmul %219, %6, %cst_42 {dimension_numbers = #tpu.dot_dimension_numbers<[1], [0], [0], [1], [0, 0, 1, 1], [], []>} : vector<8x32xbf16>, vector<32x128xbf16>, vector<8x128xf32> -> vector<8x128xf32>
    %221 = vector.extract_strided_slice %5 {offsets = [40, 0], sizes = [8, 128], strides = [1, 1]} : vector<64x128xf32> to vector<8x128xf32>
    %222 = arith.addf %220, %221 : vector<8x128xf32>
    %223 = arith.negf %222 : vector<8x128xf32>
    %224 = math.exp %223 : vector<8x128xf32>
    %cst_43 = arith.constant 1.000000e+00 : f32
    %225 = vector.broadcast %cst_43 : f32 to vector<8x128xf32>
    %226 = arith.addf %225, %224 : vector<8x128xf32>
    %227 = arith.divf %225, %226 : vector<8x128xf32>
    %228 = math.tanh %222 : vector<8x128xf32>
    %229 = vector.extract_strided_slice %227 {offsets = [0, 0], sizes = [8, 32], strides = [1, 1]} : vector<8x128xf32> to vector<8x32xf32>
    %230 = vector.extract_strided_slice %227 {offsets = [0, 32], sizes = [8, 32], strides = [1, 1]} : vector<8x128xf32> to vector<8x32xf32>
    %231 = vector.extract_strided_slice %227 {offsets = [0, 64], sizes = [8, 32], strides = [1, 1]} : vector<8x128xf32> to vector<8x32xf32>
    %232 = vector.extract_strided_slice %228 {offsets = [0, 96], sizes = [8, 32], strides = [1, 1]} : vector<8x128xf32> to vector<8x32xf32>
    %233 = arith.mulf %229, %194 : vector<8x32xf32>
    %234 = arith.mulf %230, %232 : vector<8x32xf32>
    %235 = arith.addf %233, %234 : vector<8x32xf32>
    %236 = math.tanh %194 : vector<8x32xf32>
    %237 = arith.mulf %236, %231 : vector<8x32xf32>
    %238 = arith.truncf %218 : vector<8x32xf32> to vector<8x32xbf16>
    %cst_44 = arith.constant dense<0.000000e+00> : vector<8x128xf32>
    %239 = tpu.matmul %238, %8, %cst_44 {dimension_numbers = #tpu.dot_dimension_numbers<[1], [0], [0], [1], [0, 0, 1, 1], [], []>} : vector<8x32xbf16>, vector<32x128xbf16>, vector<8x128xf32> -> vector<8x128xf32>
    %240 = arith.truncf %237 : vector<8x32xf32> to vector<8x32xbf16>
    %cst_45 = arith.constant dense<0.000000e+00> : vector<8x128xf32>
    %241 = tpu.matmul %240, %7, %cst_45 {dimension_numbers = #tpu.dot_dimension_numbers<[1], [0], [0], [1], [0, 0, 1, 1], [], []>} : vector<8x32xbf16>, vector<32x128xbf16>, vector<8x128xf32> -> vector<8x128xf32>
    %242 = arith.addf %239, %241 : vector<8x128xf32>
    %243 = vector.broadcast %9 : vector<1x128xf32> to vector<8x128xf32>
    %244 = arith.addf %242, %243 : vector<8x128xf32>
    %245 = arith.negf %244 : vector<8x128xf32>
    %246 = math.exp %245 : vector<8x128xf32>
    %cst_46 = arith.constant 1.000000e+00 : f32
    %247 = vector.broadcast %cst_46 : f32 to vector<8x128xf32>
    %248 = arith.addf %247, %246 : vector<8x128xf32>
    %249 = arith.divf %247, %248 : vector<8x128xf32>
    %250 = math.tanh %244 : vector<8x128xf32>
    %251 = vector.extract_strided_slice %249 {offsets = [0, 0], sizes = [8, 32], strides = [1, 1]} : vector<8x128xf32> to vector<8x32xf32>
    %252 = vector.extract_strided_slice %249 {offsets = [0, 32], sizes = [8, 32], strides = [1, 1]} : vector<8x128xf32> to vector<8x32xf32>
    %253 = vector.extract_strided_slice %249 {offsets = [0, 64], sizes = [8, 32], strides = [1, 1]} : vector<8x128xf32> to vector<8x32xf32>
    %254 = vector.extract_strided_slice %250 {offsets = [0, 96], sizes = [8, 32], strides = [1, 1]} : vector<8x128xf32> to vector<8x32xf32>
    %255 = arith.mulf %251, %216 : vector<8x32xf32>
    %256 = arith.mulf %252, %254 : vector<8x32xf32>
    %257 = arith.addf %255, %256 : vector<8x32xf32>
    %258 = math.tanh %216 : vector<8x32xf32>
    %259 = arith.mulf %258, %253 : vector<8x32xf32>
    %260 = arith.truncf %237 : vector<8x32xf32> to vector<8x32xbf16>
    %cst_47 = arith.constant dense<0.000000e+00> : vector<8x128xf32>
    %261 = tpu.matmul %260, %6, %cst_47 {dimension_numbers = #tpu.dot_dimension_numbers<[1], [0], [0], [1], [0, 0, 1, 1], [], []>} : vector<8x32xbf16>, vector<32x128xbf16>, vector<8x128xf32> -> vector<8x128xf32>
    %262 = vector.extract_strided_slice %5 {offsets = [48, 0], sizes = [8, 128], strides = [1, 1]} : vector<64x128xf32> to vector<8x128xf32>
    %263 = arith.addf %261, %262 : vector<8x128xf32>
    %264 = arith.negf %263 : vector<8x128xf32>
    %265 = math.exp %264 : vector<8x128xf32>
    %cst_48 = arith.constant 1.000000e+00 : f32
    %266 = vector.broadcast %cst_48 : f32 to vector<8x128xf32>
    %267 = arith.addf %266, %265 : vector<8x128xf32>
    %268 = arith.divf %266, %267 : vector<8x128xf32>
    %269 = math.tanh %263 : vector<8x128xf32>
    %270 = vector.extract_strided_slice %268 {offsets = [0, 0], sizes = [8, 32], strides = [1, 1]} : vector<8x128xf32> to vector<8x32xf32>
    %271 = vector.extract_strided_slice %268 {offsets = [0, 32], sizes = [8, 32], strides = [1, 1]} : vector<8x128xf32> to vector<8x32xf32>
    %272 = vector.extract_strided_slice %268 {offsets = [0, 64], sizes = [8, 32], strides = [1, 1]} : vector<8x128xf32> to vector<8x32xf32>
    %273 = vector.extract_strided_slice %269 {offsets = [0, 96], sizes = [8, 32], strides = [1, 1]} : vector<8x128xf32> to vector<8x32xf32>
    %274 = arith.mulf %270, %235 : vector<8x32xf32>
    %275 = arith.mulf %271, %273 : vector<8x32xf32>
    %276 = arith.addf %274, %275 : vector<8x32xf32>
    %277 = math.tanh %235 : vector<8x32xf32>
    %278 = arith.mulf %277, %272 : vector<8x32xf32>
    %279 = arith.truncf %259 : vector<8x32xf32> to vector<8x32xbf16>
    %cst_49 = arith.constant dense<0.000000e+00> : vector<8x128xf32>
    %280 = tpu.matmul %279, %8, %cst_49 {dimension_numbers = #tpu.dot_dimension_numbers<[1], [0], [0], [1], [0, 0, 1, 1], [], []>} : vector<8x32xbf16>, vector<32x128xbf16>, vector<8x128xf32> -> vector<8x128xf32>
    %281 = arith.truncf %278 : vector<8x32xf32> to vector<8x32xbf16>
    %cst_50 = arith.constant dense<0.000000e+00> : vector<8x128xf32>
    %282 = tpu.matmul %281, %7, %cst_50 {dimension_numbers = #tpu.dot_dimension_numbers<[1], [0], [0], [1], [0, 0, 1, 1], [], []>} : vector<8x32xbf16>, vector<32x128xbf16>, vector<8x128xf32> -> vector<8x128xf32>
    %283 = arith.addf %280, %282 : vector<8x128xf32>
    %284 = vector.broadcast %9 : vector<1x128xf32> to vector<8x128xf32>
    %285 = arith.addf %283, %284 : vector<8x128xf32>
    %286 = arith.negf %285 : vector<8x128xf32>
    %287 = math.exp %286 : vector<8x128xf32>
    %cst_51 = arith.constant 1.000000e+00 : f32
    %288 = vector.broadcast %cst_51 : f32 to vector<8x128xf32>
    %289 = arith.addf %288, %287 : vector<8x128xf32>
    %290 = arith.divf %288, %289 : vector<8x128xf32>
    %291 = math.tanh %285 : vector<8x128xf32>
    %292 = vector.extract_strided_slice %290 {offsets = [0, 0], sizes = [8, 32], strides = [1, 1]} : vector<8x128xf32> to vector<8x32xf32>
    %293 = vector.extract_strided_slice %290 {offsets = [0, 32], sizes = [8, 32], strides = [1, 1]} : vector<8x128xf32> to vector<8x32xf32>
    %294 = vector.extract_strided_slice %290 {offsets = [0, 64], sizes = [8, 32], strides = [1, 1]} : vector<8x128xf32> to vector<8x32xf32>
    %295 = vector.extract_strided_slice %291 {offsets = [0, 96], sizes = [8, 32], strides = [1, 1]} : vector<8x128xf32> to vector<8x32xf32>
    %296 = arith.mulf %292, %257 : vector<8x32xf32>
    %297 = arith.mulf %293, %295 : vector<8x32xf32>
    %298 = arith.addf %296, %297 : vector<8x32xf32>
    %299 = math.tanh %257 : vector<8x32xf32>
    %300 = arith.mulf %299, %294 : vector<8x32xf32>
    %301 = arith.truncf %278 : vector<8x32xf32> to vector<8x32xbf16>
    %cst_52 = arith.constant dense<0.000000e+00> : vector<8x128xf32>
    %302 = tpu.matmul %301, %6, %cst_52 {dimension_numbers = #tpu.dot_dimension_numbers<[1], [0], [0], [1], [0, 0, 1, 1], [], []>} : vector<8x32xbf16>, vector<32x128xbf16>, vector<8x128xf32> -> vector<8x128xf32>
    %303 = vector.extract_strided_slice %5 {offsets = [56, 0], sizes = [8, 128], strides = [1, 1]} : vector<64x128xf32> to vector<8x128xf32>
    %304 = arith.addf %302, %303 : vector<8x128xf32>
    %305 = arith.negf %304 : vector<8x128xf32>
    %306 = math.exp %305 : vector<8x128xf32>
    %cst_53 = arith.constant 1.000000e+00 : f32
    %307 = vector.broadcast %cst_53 : f32 to vector<8x128xf32>
    %308 = arith.addf %307, %306 : vector<8x128xf32>
    %309 = arith.divf %307, %308 : vector<8x128xf32>
    %310 = vector.extract_strided_slice %309 {offsets = [0, 64], sizes = [8, 32], strides = [1, 1]} : vector<8x128xf32> to vector<8x32xf32>
    %311 = math.tanh %276 : vector<8x32xf32>
    %312 = arith.mulf %311, %310 : vector<8x32xf32>
    %313 = arith.truncf %300 : vector<8x32xf32> to vector<8x32xbf16>
    %cst_54 = arith.constant dense<0.000000e+00> : vector<8x128xf32>
    %314 = tpu.matmul %313, %8, %cst_54 {dimension_numbers = #tpu.dot_dimension_numbers<[1], [0], [0], [1], [0, 0, 1, 1], [], []>} : vector<8x32xbf16>, vector<32x128xbf16>, vector<8x128xf32> -> vector<8x128xf32>
    %315 = arith.truncf %312 : vector<8x32xf32> to vector<8x32xbf16>
    %cst_55 = arith.constant dense<0.000000e+00> : vector<8x128xf32>
    %316 = tpu.matmul %315, %7, %cst_55 {dimension_numbers = #tpu.dot_dimension_numbers<[1], [0], [0], [1], [0, 0, 1, 1], [], []>} : vector<8x32xbf16>, vector<32x128xbf16>, vector<8x128xf32> -> vector<8x128xf32>
    %317 = arith.addf %314, %316 : vector<8x128xf32>
    %318 = vector.broadcast %9 : vector<1x128xf32> to vector<8x128xf32>
    %319 = arith.addf %317, %318 : vector<8x128xf32>
    %320 = arith.negf %319 : vector<8x128xf32>
    %321 = math.exp %320 : vector<8x128xf32>
    %cst_56 = arith.constant 1.000000e+00 : f32
    %322 = vector.broadcast %cst_56 : f32 to vector<8x128xf32>
    %323 = arith.addf %322, %321 : vector<8x128xf32>
    %324 = arith.divf %322, %323 : vector<8x128xf32>
    %325 = vector.extract_strided_slice %324 {offsets = [0, 64], sizes = [8, 32], strides = [1, 1]} : vector<8x128xf32> to vector<8x32xf32>
    %326 = math.tanh %298 : vector<8x32xf32>
    %327 = arith.mulf %326, %325 : vector<8x32xf32>
    %c0_57 = arith.constant 0 : index
    %c0_58 = arith.constant 0 : index
    %328 = vector.load %arg8[%c0_57, %c0_58] : memref<8x32xf32, #tpu.memory_space<vmem>>, vector<8x32xf32>
    tpu.vector_store %arg8[%c0_57, %c0_58], %327 {strides = array<i32>} : memref<8x32xf32, #tpu.memory_space<vmem>>, vector<8x32xf32>,
    return
  }
  func.func @transform_0(%arg0: i32) -> (i32, i32) {
    %c0_i32 = arith.constant 0 : i32
    %c0_i32_0 = arith.constant 0 : i32
    %c0_i32_1 = arith.constant 0 : i32
    return %c0_i32, %c0_i32_0 : i32, i32
  }
  func.func @transform_1(%arg0: i32) -> (i32, i32) {
    %c0_i32 = arith.constant 0 : i32
    %c0_i32_0 = arith.constant 0 : i32
    %c0_i32_1 = arith.constant 0 : i32
    return %c0_i32, %c0_i32_0 : i32, i32
  }
  func.func @transform_2(%arg0: i32) -> (i32, i32) {
    %c0_i32 = arith.constant 0 : i32
    %c0_i32_0 = arith.constant 0 : i32
    %c0_i32_1 = arith.constant 0 : i32
    return %c0_i32, %c0_i32_0 : i32, i32
  }
  func.func @transform_3(%arg0: i32) -> (i32, i32) {
    %c0_i32 = arith.constant 0 : i32
    %c0_i32_0 = arith.constant 0 : i32
    %c0_i32_1 = arith.constant 0 : i32
    return %c0_i32, %c0_i32_0 : i32, i32
  }
  func.func @transform_4(%arg0: i32) -> (i32, i32) {
    %c0_i32 = arith.constant 0 : i32
    %c0_i32_0 = arith.constant 0 : i32
    %c0_i32_1 = arith.constant 0 : i32
    return %c0_i32, %c0_i32_0 : i32, i32
  }
  func.func @transform_5(%arg0: i32) -> (i32, i32) {
    %c0_i32 = arith.constant 0 : i32
    %c0_i32_0 = arith.constant 0 : i32
    %c0_i32_1 = arith.constant 0 : i32
    return %c0_i32, %c0_i32_0 : i32, i32
  }
  func.func @transform_6(%arg0: i32) -> (i32, i32) {
    %c0_i32 = arith.constant 0 : i32
    %c0_i32_0 = arith.constant 0 : i32
    %c0_i32_1 = arith.constant 0 : i32
    return %c0_i32, %c0_i32_0 : i32, i32
  }
  func.func @transform_7(%arg0: i32) -> (i32, i32) {
    %c0_i32 = arith.constant 0 : i32
    %c0_i32_0 = arith.constant 0 : i32
    %c0_i32_1 = arith.constant 0 : i32
    return %c0_i32, %c0_i32_0 : i32, i32
  }
}

</mosaic_0001>

<llo_original>
// kernel: tpu_custom_call.1
$region0: #{tpu_custom_call.1}
  #allocation0 [shape = 'u32[]', space=smem, size = 0x4, offset = 0x4, fixed_abs, tag = 'smem constant byte address 0x4 - core index']
  #allocation1 [shape = 'u32[144,128]{1,0:T(1,128)}', space=vmem, size = 0x12000, scoped, tag = 'internal scratch']
  %s0 = inlined_call_operand.hbm [shape: bf16[64,1024], index: 0, kind: input, shape index: {}]
  %s1 = inlined_call_operand.hbm [shape: bf16[1024,128], index: 1, kind: input, shape index: {}]
  %s2 = inlined_call_operand.vmem [shape: f32[1,128], index: 2, kind: input, shape index: {}]
  %s3 = inlined_call_operand.hbm [shape: bf16[32,128], index: 3, kind: input, shape index: {}]
  %s4 = inlined_call_operand.hbm [shape: bf16[32,128], index: 4, kind: input, shape index: {}]
  %s5 = inlined_call_operand.vmem [shape: bf16[32,128], index: 5, kind: input, shape index: {}]
  %s6 = inlined_call_operand.vmem [shape: f32[1,128], index: 6, kind: input, shape index: {}]
  %s7 = inlined_call_operand.hbm [shape: f32[8,32], index: 7, kind: output, shape index: {}]
  %s8 = sld [smem:[#allocation0]]
  $region54: #{tpu_custom_call.1} parent=0
    _
  %s10 = ssub.s32 1, %s8
  %s11 = scalar_select 0, %s10, %s8
  $region1: #{tpu_custom_call.1} parent=0
    #allocation2 [shape = 'u8[131072]{0}', space=vmem, size = 0x20000, scoped, tag = 'input window, operand 0, single buffered']
    #allocation3 [shape = 's32[1]{0}', space=sflag, size = 0x4, scoped, tag = 'scoped memory for tpu_custom_call.1']
    #allocation4 [shape = 's32[1]{0}', space=sflag, size = 0x4, scoped, tag = 'scoped memory for tpu_custom_call.1']
    #allocation5 [shape = 'u8[262144]{0}', space=vmem, size = 0x40000, scoped, tag = 'input window, operand 1, single buffered']
    #allocation6 [shape = 's32[1]{0}', space=sflag, size = 0x4, scoped, tag = 'scoped memory for tpu_custom_call.1']
    #allocation7 [shape = 'u8[8192]{0}', space=vmem, size = 0x2000, scoped, tag = 'input window, operand 3, single buffered']
    #allocation8 [shape = 'u8[8192]{0}', space=vmem, size = 0x2000, scoped, tag = 'input window, operand 4, single buffered']
    #allocation9 [shape = 's32[1]{0}', space=sflag, size = 0x4, scoped, tag = 'scoped memory for tpu_custom_call.1']
    #allocation10 [shape = 'u8[4096]{0}', space=vmem, size = 0x1000, scoped, tag = 'output window, operand 0, single buffered']
    %12 = vsyncpa [#allocation3], 0
    %13 = vsyncpa [#allocation6], 0
    %14 = vsyncpa [#allocation9], 0
    %15 = vsyncpa [#allocation4], 0
    // Predicated region
    $region2: #{tpu_custom_call.1} parent=1 // pred_check
      _
    $region3: #{tpu_custom_call.1} parent=1 // pred_check_branch
      %17 = sbr.rel (0) target = $region5
    $region4: #{tpu_custom_call.1} parent=1 // pred_region
      %s19 = ssub.s32 4096, 4096
      %20 = vsyncadd [#allocation3], %s19
      %s21 = sshll.u32 [#allocation2], 4
      %s22 = int_to_ptr.vmem [resolvable:$true] %s21
      %27 = dma.hbm_to_vmem [thread:$0]  %s0, 4096, %s22, [#allocation3], 512, 512, 32
    $region5: #{tpu_custom_call.1} parent=1 // pred_fallthru
      _
    // Predicated region
    $region6: #{tpu_custom_call.1} parent=1 // pred_check
      _
    $region7: #{tpu_custom_call.1} parent=1 // pred_check_branch
      %29 = sbr.rel (0) target = $region9
    $region8: #{tpu_custom_call.1} parent=1 // pred_region
      %s31 = ssub.s32 8192, 8192
      %32 = vsyncadd [#allocation6], %s31
      %s33 = sshll.u32 [#allocation5], 4
      %s34 = int_to_ptr.vmem [resolvable:$true] %s33
      %39 = dma.hbm_to_vmem [thread:$0]  %s1, 8192, %s34, [#allocation6], 64, 64, 4
    $region9: #{tpu_custom_call.1} parent=1 // pred_fallthru
      _
    // Predicated region
    $region10: #{tpu_custom_call.1} parent=1 // pred_check
      _
    $region11: #{tpu_custom_call.1} parent=1 // pred_check_branch
      %41 = sbr.rel (0) target = $region13
    $region12: #{tpu_custom_call.1} parent=1 // pred_region
      _
    $region13: #{tpu_custom_call.1} parent=1 // pred_fallthru
      _
    // Predicated region
    $region14: #{tpu_custom_call.1} parent=1 // pred_check
      _
    $region15: #{tpu_custom_call.1} parent=1 // pred_check_branch
      %43 = sbr.rel (0) target = $region17
    $region16: #{tpu_custom_call.1} parent=1 // pred_region
      %s45 = ssub.s32 256, 256
      %46 = vsyncadd [#allocation6], %s45
      %s47 = sshll.u32 [#allocation7], 4
      %s48 = int_to_ptr.vmem [resolvable:$true] %s47
      %53 = dma.hbm_to_vmem [thread:$0]  %s3, 256, %s48, [#allocation6], 64, 64, 4
    $region17: #{tpu_custom_call.1} parent=1 // pred_fallthru
      _
    // Predicated region
    $region18: #{tpu_custom_call.1} parent=1 // pred_check
      _
    $region19: #{tpu_custom_call.1} parent=1 // pred_check_branch
      %55 = sbr.rel (0) target = $region21
    $region20: #{tpu_custom_call.1} parent=1 // pred_region
      %s57 = ssub.s32 256, 256
      %58 = vsyncadd [#allocation9], %s57
      %s59 = sshll.u32 [#allocation8], 4
      %s60 = int_to_ptr.vmem [resolvable:$true] %s59
      %65 = dma.hbm_to_vmem [thread:$0]  %s4, 256, %s60, [#allocation9], 64, 64, 4
    $region21: #{tpu_custom_call.1} parent=1 // pred_fallthru
      _
    // Predicated region
    $region22: #{tpu_custom_call.1} parent=1 // pred_check
      _
    $region23: #{tpu_custom_call.1} parent=1 // pred_check_branch
      %67 = sbr.rel (0) target = $region25
    $region24: #{tpu_custom_call.1} parent=1 // pred_region
      _
    $region25: #{tpu_custom_call.1} parent=1 // pred_fallthru
      _
    // Predicated region
    $region26: #{tpu_custom_call.1} parent=1 // pred_check
      _
    $region27: #{tpu_custom_call.1} parent=1 // pred_check_branch
      %69 = sbr.rel (0) target = $region29
    $region28: #{tpu_custom_call.1} parent=1 // pred_region
      _
    $region29: #{tpu_custom_call.1} parent=1 // pred_fallthru
      _
    // Predicated region
    $region30: #{tpu_custom_call.1} parent=1 // pred_check
      _
    $region31: #{tpu_custom_call.1} parent=1 // pred_check_branch
      %71 = sbr.rel (0) target = $region33
    $region32: #{tpu_custom_call.1} parent=1 // pred_region
      %72 = dma.done [#allocation3], 4096
    $region33: #{tpu_custom_call.1} parent=1 // pred_fallthru
      _
    // Predicated region
    $region34: #{tpu_custom_call.1} parent=1 // pred_check
      _
    $region35: #{tpu_custom_call.1} parent=1 // pred_check_branch
      %74 = sbr.rel (0) target = $region37
    $region36: #{tpu_custom_call.1} parent=1 // pred_region
      %75 = dma.done [#allocation6], 8192
    $region37: #{tpu_custom_call.1} parent=1 // pred_fallthru
      _
    // Predicated region
    $region38: #{tpu_custom_call.1} parent=1 // pred_check
      _
    $region39: #{tpu_custom_call.1} parent=1 // pred_check_branch
      %77 = sbr.rel (0) target = $region41
    $region40: #{tpu_custom_call.1} parent=1 // pred_region
      %78 = dma.done [#allocation6], 256
    $region41: #{tpu_custom_call.1} parent=1 // pred_fallthru
      _
    // Predicated region
    $region42: #{tpu_custom_call.1} parent=1 // pred_check
      _
    $region43: #{tpu_custom_call.1} parent=1 // pred_check_branch
      %80 = sbr.rel (0) target = $region45
    $region44: #{tpu_custom_call.1} parent=1 // pred_region
      %81 = dma.done [#allocation9], 256
    $region45: #{tpu_custom_call.1} parent=1 // pred_fallthru
      _
    %v83 = vld [vmem:[#allocation2] sm:$0xff]
    %v84 = vld [vmem:[#allocation2 + $0x8] sm:$0xff]
    %v85 = vld [vmem:[#allocation2 + $0x10] sm:$0xff]
    %v86 = vld [vmem:[#allocation2 + $0x18] sm:$0xff]
    %v87 = vld [vmem:[#allocation2 + $0x20] sm:$0xff]
    %v88 = vld [vmem:[#allocation2 + $0x28] sm:$0xff]
    %v89 = vld [vmem:[#allocation2 + $0x30] sm:$0xff]
    %v90 = vld [vmem:[#allocation2 + $0x38] sm:$0xff]
    %v91 = vld [vmem:[#allocation2 + $0x40] sm:$0xff]
    %v92 = vld [vmem:[#allocation2 + $0x48] sm:$0xff]
    %v93 = vld [vmem:[#allocation2 + $0x50] sm:$0xff]
    %v94 = vld [vmem:[#allocation2 + $0x58] sm:$0xff]
    %v95 = vld [vmem:[#allocation2 + $0x60] sm:$0xff]
    %v96 = vld [vmem:[#allocation2 + $0x68] sm:$0xff]
    %v97 = vld [vmem:[#allocation2 + $0x70] sm:$0xff]
    %v98 = vld [vmem:[#allocation2 + $0x78] sm:$0xff]
    %v99 = vld [vmem:[#allocation2 + $0x80] sm:$0xff]
    %v100 = vld [vmem:[#allocation2 + $0x88] sm:$0xff]
    %v101 = vld [vmem:[#allocation2 + $0x90] sm:$0xff]
    %v102 = vld [vmem:[#allocation2 + $0x98] sm:$0xff]
    %v103 = vld [vmem:[#allocation2 + $0xa0] sm:$0xff]
    %v104 = vld [vmem:[#allocation2 + $0xa8] sm:$0xff]
    %v105 = vld [vmem:[#allocation2 + $0xb0] sm:$0xff]
    %v106 = vld [vmem:[#allocation2 + $0xb8] sm:$0xff]
    %v107 = vld [vmem:[#allocation2 + $0xc0] sm:$0xff]
    %v108 = vld [vmem:[#allocation2 + $0xc8] sm:$0xff]
    %v109 = vld [vmem:[#allocation2 + $0xd0] sm:$0xff]
    %v110 = vld [vmem:[#allocation2 + $0xd8] sm:$0xff]
    %v111 = vld [vmem:[#allocation2 + $0xe0] sm:$0xff]
    %v112 = vld [vmem:[#allocation2 + $0xe8] sm:$0xff]
    %v113 = vld [vmem:[#allocation2 + $0xf0] sm:$0xff]
    %v114 = vld [vmem:[#allocation2 + $0xf8] sm:$0xff]
    %v115 = vld [vmem:[#allocation5] sm:$0xf]
    %v116 = vld [vmem:[#allocation5 + $0x4] sm:$0xf]
    %v117 = vld [vmem:[#allocation5 + $0x8] sm:$0xf]
    %v118 = vld [vmem:[#allocation5 + $0xc] sm:$0xf]
    %v119 = vld [vmem:[#allocation5 + $0x10] sm:$0xf]
    %v120 = vld [vmem:[#allocation5 + $0x14] sm:$0xf]
    %v121 = vld [vmem:[#allocation5 + $0x18] sm:$0xf]
    %v122 = vld [vmem:[#allocation5 + $0x1c] sm:$0xf]
    %v123 = vld [vmem:[#allocation5 + $0x20] sm:$0xf]
    %v124 = vld [vmem:[#allocation5 + $0x24] sm:$0xf]
    %v125 = vld [vmem:[#allocation5 + $0x28] sm:$0xf]
    %v126 = vld [vmem:[#allocation5 + $0x2c] sm:$0xf]
    %v127 = vld [vmem:[#allocation5 + $0x30] sm:$0xf]
    %v128 = vld [vmem:[#allocation5 + $0x34] sm:$0xf]
    %v129 = vld [vmem:[#allocation5 + $0x38] sm:$0xf]
    %v130 = vld [vmem:[#allocation5 + $0x3c] sm:$0xf]
    %v131 = vld [vmem:[#allocation5 + $0x40] sm:$0xf]
    %v132 = vld [vmem:[#allocation5 + $0x44] sm:$0xf]
    %v133 = vld [vmem:[#allocation5 + $0x48] sm:$0xf]
    %v134 = vld [vmem:[#allocation5 + $0x4c] sm:$0xf]
    %v135 = vld [vmem:[#allocation5 + $0x50] sm:$0xf]
    %v136 = vld [vmem:[#allocation5 + $0x54] sm:$0xf]
    %v137 = vld [vmem:[#allocation5 + $0x58] sm:$0xf]
    %v138 = vld [vmem:[#allocation5 + $0x5c] sm:$0xf]
    %v139 = vld [vmem:[#allocation5 + $0x60] sm:$0xf]
    %v140 = vld [vmem:[#allocation5 + $0x64] sm:$0xf]
    %v141 = vld [vmem:[#allocation5 + $0x68] sm:$0xf]
    %v142 = vld [vmem:[#allocation5 + $0x6c] sm:$0xf]
    %v143 = vld [vmem:[#allocation5 + $0x70] sm:$0xf]
    %v144 = vld [vmem:[#allocation5 + $0x74] sm:$0xf]
    %v145 = vld [vmem:[#allocation5 + $0x78] sm:$0xf]
    %v146 = vld [vmem:[#allocation5 + $0x7c] sm:$0xf]
    %v147 = vld [vmem:[#allocation5 + $0x80] sm:$0xf]
    %v148 = vld [vmem:[#allocation5 + $0x84] sm:$0xf]
    %v149 = vld [vmem:[#allocation5 + $0x88] sm:$0xf]
    %v150 = vld [vmem:[#allocation5 + $0x8c] sm:$0xf]
    %v151 = vld [vmem:[#allocation5 + $0x90] sm:$0xf]
    %v152 = vld [vmem:[#allocation5 + $0x94] sm:$0xf]
    %v153 = vld [vmem:[#allocation5 + $0x98] sm:$0xf]
    %v154 = vld [vmem:[#allocation5 + $0x9c] sm:$0xf]
    %v155 = vld [vmem:[#allocation5 + $0xa0] sm:$0xf]
    %v156 = vld [vmem:[#allocation5 + $0xa4] sm:$0xf]
    %v157 = vld [vmem:[#allocation5 + $0xa8] sm:$0xf]
    %v158 = vld [vmem:[#allocation5 + $0xac] sm:$0xf]
    %v159 = vld [vmem:[#allocation5 + $0xb0] sm:$0xf]
    %v160 = vld [vmem:[#allocation5 + $0xb4] sm:$0xf]
    %v161 = vld [vmem:[#allocation5 + $0xb8] sm:$0xf]
    %v162 = vld [vmem:[#allocation5 + $0xbc] sm:$0xf]
    %v163 = vld [vmem:[#allocation5 + $0xc0] sm:$0xf]
    %v164 = vld [vmem:[#allocation5 + $0xc4] sm:$0xf]
    %v165 = vld [vmem:[#allocation5 + $0xc8] sm:$0xf]
    %v166 = vld [vmem:[#allocation5 + $0xcc] sm:$0xf]
    %v167 = vld [vmem:[#allocation5 + $0xd0] sm:$0xf]
    %v168 = vld [vmem:[#allocation5 + $0xd4] sm:$0xf]
    %v169 = vld [vmem:[#allocation5 + $0xd8] sm:$0xf]
    %v170 = vld [vmem:[#allocation5 + $0xdc] sm:$0xf]
    %v171 = vld [vmem:[#allocation5 + $0xe0] sm:$0xf]
    %v172 = vld [vmem:[#allocation5 + $0xe4] sm:$0xf]
    %v173 = vld [vmem:[#allocation5 + $0xe8] sm:$0xf]
    %v174 = vld [vmem:[#allocation5 + $0xec] sm:$0xf]
    %v175 = vld [vmem:[#allocation5 + $0xf0] sm:$0xf]
    %v176 = vld [vmem:[#allocation5 + $0xf4] sm:$0xf]
    %v177 = vld [vmem:[#allocation5 + $0xf8] sm:$0xf]
    %v178 = vld [vmem:[#allocation5 + $0xfc] sm:$0xf]
    %v179 = vld [vmem:[#allocation5 + $0x100] sm:$0xf]
    %v180 = vld [vmem:[#allocation5 + $0x104] sm:$0xf]
    %v181 = vld [vmem:[#allocation5 + $0x108] sm:$0xf]
    %v182 = vld [vmem:[#allocation5 + $0x10c] sm:$0xf]
    %v183 = vld [vmem:[#allocation5 + $0x110] sm:$0xf]
    %v184 = vld [vmem:[#allocation5 + $0x114] sm:$0xf]
    %v185 = vld [vmem:[#allocation5 + $0x118] sm:$0xf]
    %v186 = vld [vmem:[#allocation5 + $0x11c] sm:$0xf]
    %v187 = vld [vmem:[#allocation5 + $0x120] sm:$0xf]
    %v188 = vld [vmem:[#allocation5 + $0x124] sm:$0xf]
    %v189 = vld [vmem:[#allocation5 + $0x128] sm:$0xf]
    %v190 = vld [vmem:[#allocation5 + $0x12c] sm:$0xf]
    %v191 = vld [vmem:[#allocation5 + $0x130] sm:$0xf]
    %v192 = vld [vmem:[#allocation5 + $0x134] sm:$0xf]
    %v193 = vld [vmem:[#allocation5 + $0x138] sm:$0xf]
    %v194 = vld [vmem:[#allocation5 + $0x13c] sm:$0xf]
    %v195 = vld [vmem:[#allocation5 + $0x140] sm:$0xf]
    %v196 = vld [vmem:[#allocation5 + $0x144] sm:$0xf]
    %v197 = vld [vmem:[#allocation5 + $0x148] sm:$0xf]
    %v198 = vld [vmem:[#allocation5 + $0x14c] sm:$0xf]
    %v199 = vld [vmem:[#allocation5 + $0x150] sm:$0xf]
    %v200 = vld [vmem:[#allocation5 + $0x154] sm:$0xf]
    %v201 = vld [vmem:[#allocation5 + $0x158] sm:$0xf]
    %v202 = vld [vmem:[#allocation5 + $0x15c] sm:$0xf]
    %v203 = vld [vmem:[#allocation5 + $0x160] sm:$0xf]
    %v204 = vld [vmem:[#allocation5 + $0x164] sm:$0xf]
    %v205 = vld [vmem:[#allocation5 + $0x168] sm:$0xf]
    %v206 = vld [vmem:[#allocation5 + $0x16c] sm:$0xf]
    %v207 = vld [vmem:[#allocation5 + $0x170] sm:$0xf]
    %v208 = vld [vmem:[#allocation5 + $0x174] sm:$0xf]
    %v209 = vld [vmem:[#allocation5 + $0x178] sm:$0xf]
    %v210 = vld [vmem:[#allocation5 + $0x17c] sm:$0xf]
    %v211 = vld [vmem:[#allocation5 + $0x180] sm:$0xf]
    %v212 = vld [vmem:[#allocation5 + $0x184] sm:$0xf]
    %v213 = vld [vmem:[#allocation5 + $0x188] sm:$0xf]
    %v214 = vld [vmem:[#allocation5 + $0x18c] sm:$0xf]
    %v215 = vld [vmem:[#allocation5 + $0x190] sm:$0xf]
    %v216 = vld [vmem:[#allocation5 + $0x194] sm:$0xf]
    %v217 = vld [vmem:[#allocation5 + $0x198] sm:$0xf]
    %v218 = vld [vmem:[#allocation5 + $0x19c] sm:$0xf]
    %v219 = vld [vmem:[#allocation5 + $0x1a0] sm:$0xf]
    %v220 = vld [vmem:[#allocation5 + $0x1a4] sm:$0xf]
    %v221 = vld [vmem:[#allocation5 + $0x1a8] sm:$0xf]
    %v222 = vld [vmem:[#allocation5 + $0x1ac] sm:$0xf]
    %v223 = vld [vmem:[#allocation5 + $0x1b0] sm:$0xf]
    %v224 = vld [vmem:[#allocation5 + $0x1b4] sm:$0xf]
    %v225 = vld [vmem:[#allocation5 + $0x1b8] sm:$0xf]
    %v226 = vld [vmem:[#allocation5 + $0x1bc] sm:$0xf]
    %v227 = vld [vmem:[#allocation5 + $0x1c0] sm:$0xf]
    %v228 = vld [vmem:[#allocation5 + $0x1c4] sm:$0xf]
    %v229 = vld [vmem:[#allocation5 + $0x1c8] sm:$0xf]
    %v230 = vld [vmem:[#allocation5 + $0x1cc] sm:$0xf]
    %v231 = vld [vmem:[#allocation5 + $0x1d0] sm:$0xf]
    %v232 = vld [vmem:[#allocation5 + $0x1d4] sm:$0xf]
    %v233 = vld [vmem:[#allocation5 + $0x1d8] sm:$0xf]
    %v234 = vld [vmem:[#allocation5 + $0x1dc] sm:$0xf]
    %v235 = vld [vmem:[#allocation5 + $0x1e0] sm:$0xf]
    %v236 = vld [vmem:[#allocation5 + $0x1e4] sm:$0xf]
    %v237 = vld [vmem:[#allocation5 + $0x1e8] sm:$0xf]
    %v238 = vld [vmem:[#allocation5 + $0x1ec] sm:$0xf]
    %v239 = vld [vmem:[#allocation5 + $0x1f0] sm:$0xf]
    %v240 = vld [vmem:[#allocation5 + $0x1f4] sm:$0xf]
    %v241 = vld [vmem:[#allocation5 + $0x1f8] sm:$0xf]
    %v242 = vld [vmem:[#allocation5 + $0x1fc] sm:$0xf]
    %v243 = vld [vmem:[%s2] sm:$0x1]
    %v245 = vlaneseq
    %v246 = vshrl.u32 %v245, 7
    %v247 = vsub.s32 0, %v246
    %v248 = vrot.slane %v243, %v247
    %v282 = vunpack.c.l.b16 %v83
    %v283 = vunpack.c.h.b16 %v83
    %v284 = vunpack.c.l.b16 %v84
    %v285 = vunpack.c.h.b16 %v84
    %v286 = vunpack.c.l.b16 %v85
    %v287 = vunpack.c.h.b16 %v85
    %v288 = vunpack.c.l.b16 %v86
    %v289 = vunpack.c.h.b16 %v86
    %v290 = vunpack.c.l.b16 %v87
    %v291 = vunpack.c.h.b16 %v87
    %v292 = vunpack.c.l.b16 %v88
    %v293 = vunpack.c.h.b16 %v88
    %v294 = vunpack.c.l.b16 %v89
    %v295 = vunpack.c.h.b16 %v89
    %v296 = vunpack.c.l.b16 %v90
    %v297 = vunpack.c.h.b16 %v90
    %v298 = vunpack.c.l.b16 %v91
    %v299 = vunpack.c.h.b16 %v91
    %v300 = vunpack.c.l.b16 %v92
    %v301 = vunpack.c.h.b16 %v92
    %v302 = vunpack.c.l.b16 %v93
    %v303 = vunpack.c.h.b16 %v93
    %v304 = vunpack.c.l.b16 %v94
    %v305 = vunpack.c.h.b16 %v94
    %v306 = vunpack.c.l.b16 %v95
    %v307 = vunpack.c.h.b16 %v95
    %v308 = vunpack.c.l.b16 %v96
    %v309 = vunpack.c.h.b16 %v96
    %v310 = vunpack.c.l.b16 %v97
    %v311 = vunpack.c.h.b16 %v97
    %v312 = vunpack.c.l.b16 %v98
    %v313 = vunpack.c.h.b16 %v98
    %v314 = vunpack.c.l.b16 %v99
    %v315 = vunpack.c.h.b16 %v99
    %v316 = vunpack.c.l.b16 %v100
    %v317 = vunpack.c.h.b16 %v100
    %v318 = vunpack.c.l.b16 %v101
    %v319 = vunpack.c.h.b16 %v101
    %v320 = vunpack.c.l.b16 %v102
    %v321 = vunpack.c.h.b16 %v102
    %v322 = vunpack.c.l.b16 %v103
    %v323 = vunpack.c.h.b16 %v103
    %v324 = vunpack.c.l.b16 %v104
    %v325 = vunpack.c.h.b16 %v104
    %v326 = vunpack.c.l.b16 %v105
    %v327 = vunpack.c.h.b16 %v105
    %v328 = vunpack.c.l.b16 %v106
    %v329 = vunpack.c.h.b16 %v106
    %v330 = vunpack.c.l.b16 %v107
    %v331 = vunpack.c.h.b16 %v107
    %v332 = vunpack.c.l.b16 %v108
    %v333 = vunpack.c.h.b16 %v108
    %v334 = vunpack.c.l.b16 %v109
    %v335 = vunpack.c.h.b16 %v109
    %v336 = vunpack.c.l.b16 %v110
    %v337 = vunpack.c.h.b16 %v110
    %v338 = vunpack.c.l.b16 %v111
    %v339 = vunpack.c.h.b16 %v111
    %v340 = vunpack.c.l.b16 %v112
    %v341 = vunpack.c.h.b16 %v112
    %v342 = vunpack.c.l.b16 %v113
    %v343 = vunpack.c.h.b16 %v113
    %v344 = vunpack.c.l.b16 %v114
    %v345 = vunpack.c.h.b16 %v114
    %v346 = vpack.c.b16 %v290, %v282
    %v347 = vpack.c.b16 %v291, %v283
    %v348 = vpack.c.b16 %v292, %v284
    %v349 = vpack.c.b16 %v293, %v285
    %v350 = vpack.c.b16 %v294, %v286
    %v351 = vpack.c.b16 %v295, %v287
    %v352 = vpack.c.b16 %v296, %v288
    %v353 = vpack.c.b16 %v297, %v289
    %v354 = vpack.c.b16 %v306, %v298
    %v355 = vpack.c.b16 %v307, %v299
    %v356 = vpack.c.b16 %v308, %v300
    %v357 = vpack.c.b16 %v309, %v301
    %v358 = vpack.c.b16 %v310, %v302
    %v359 = vpack.c.b16 %v311, %v303
    %v360 = vpack.c.b16 %v312, %v304
    %v361 = vpack.c.b16 %v313, %v305
    %v362 = vpack.c.b16 %v322, %v314
    %v363 = vpack.c.b16 %v323, %v315
    %v364 = vpack.c.b16 %v324, %v316
    %v365 = vpack.c.b16 %v325, %v317
    %v366 = vpack.c.b16 %v326, %v318
    %v367 = vpack.c.b16 %v327, %v319
    %v368 = vpack.c.b16 %v328, %v320
    %v369 = vpack.c.b16 %v329, %v321
    %v370 = vpack.c.b16 %v338, %v330
    %v371 = vpack.c.b16 %v339, %v331
    %v372 = vpack.c.b16 %v340, %v332
    %v373 = vpack.c.b16 %v341, %v333
    %v374 = vpack.c.b16 %v342, %v334
    %v375 = vpack.c.b16 %v343, %v335
    %v376 = vpack.c.b16 %v344, %v336
    %v377 = vpack.c.b16 %v345, %v337
    %v538 = vunpack.c.l.b16 %v115
    %v539 = vunpack.c.l.b16 %v116
    %v540 = vunpack.c.l.b16 %v117
    %v541 = vunpack.c.l.b16 %v118
    %v542 = vunpack.c.l.b16 %v119
    %v543 = vunpack.c.l.b16 %v120
    %v544 = vunpack.c.l.b16 %v121
    %v545 = vunpack.c.l.b16 %v122
    %v546 = vunpack.c.l.b16 %v123
    %v547 = vunpack.c.l.b16 %v124
    %v548 = vunpack.c.l.b16 %v125
    %v549 = vunpack.c.l.b16 %v126
    %v550 = vunpack.c.l.b16 %v127
    %v551 = vunpack.c.l.b16 %v128
    %v552 = vunpack.c.l.b16 %v129
    %v553 = vunpack.c.l.b16 %v130
    %v554 = vunpack.c.l.b16 %v131
    %v555 = vunpack.c.l.b16 %v132
    %v556 = vunpack.c.l.b16 %v133
    %v557 = vunpack.c.l.b16 %v134
    %v558 = vunpack.c.l.b16 %v135
    %v559 = vunpack.c.l.b16 %v136
    %v560 = vunpack.c.l.b16 %v137
    %v561 = vunpack.c.l.b16 %v138
    %v562 = vunpack.c.l.b16 %v139
    %v563 = vunpack.c.l.b16 %v140
    %v564 = vunpack.c.l.b16 %v141
    %v565 = vunpack.c.l.b16 %v142
    %v566 = vunpack.c.l.b16 %v143
    %v567 = vunpack.c.l.b16 %v144
    %v568 = vunpack.c.l.b16 %v145
    %v569 = vunpack.c.l.b16 %v146
    %v570 = vunpack.c.l.b16 %v147
    %v571 = vunpack.c.l.b16 %v148
    %v572 = vunpack.c.l.b16 %v149
    %v573 = vunpack.c.l.b16 %v150
    %v574 = vunpack.c.l.b16 %v151
    %v575 = vunpack.c.l.b16 %v152
    %v576 = vunpack.c.l.b16 %v153
    %v577 = vunpack.c.l.b16 %v154
    %v578 = vunpack.c.l.b16 %v155
    %v579 = vunpack.c.l.b16 %v156
    %v580 = vunpack.c.l.b16 %v157
    %v581 = vunpack.c.l.b16 %v158
    %v582 = vunpack.c.l.b16 %v159
    %v583 = vunpack.c.l.b16 %v160
    %v584 = vunpack.c.l.b16 %v161
    %v585 = vunpack.c.l.b16 %v162
    %v586 = vunpack.c.l.b16 %v163
    %v587 = vunpack.c.l.b16 %v164
    %v588 = vunpack.c.l.b16 %v165
    %v589 = vunpack.c.l.b16 %v166
    %v590 = vunpack.c.l.b16 %v167
    %v591 = vunpack.c.l.b16 %v168
    %v592 = vunpack.c.l.b16 %v169
    %v593 = vunpack.c.l.b16 %v170
    %v594 = vunpack.c.l.b16 %v171
    %v595 = vunpack.c.l.b16 %v172
    %v596 = vunpack.c.l.b16 %v173
    %v597 = vunpack.c.l.b16 %v174
    %v598 = vunpack.c.l.b16 %v175
    %v599 = vunpack.c.l.b16 %v176
    %v600 = vunpack.c.l.b16 %v177
    %v601 = vunpack.c.l.b16 %v178
    %v602 = vunpack.c.l.b16 %v179
    %v603 = vunpack.c.l.b16 %v180
    %v604 = vunpack.c.l.b16 %v181
    %v605 = vunpack.c.l.b16 %v182
    %v606 = vunpack.c.l.b16 %v183
    %v607 = vunpack.c.l.b16 %v184
    %v608 = vunpack.c.l.b16 %v185
    %v609 = vunpack.c.l.b16 %v186
    %v610 = vunpack.c.l.b16 %v187
    %v611 = vunpack.c.l.b16 %v188
    %v612 = vunpack.c.l.b16 %v189
    %v613 = vunpack.c.l.b16 %v190
    %v614 = vunpack.c.l.b16 %v191
    %v615 = vunpack.c.l.b16 %v192
    %v616 = vunpack.c.l.b16 %v193
    %v617 = vunpack.c.l.b16 %v194
    %v618 = vunpack.c.l.b16 %v195
    %v619 = vunpack.c.l.b16 %v196
    %v620 = vunpack.c.l.b16 %v197
    %v621 = vunpack.c.l.b16 %v198
    %v622 = vunpack.c.l.b16 %v199
    %v623 = vunpack.c.l.b16 %v200
    %v624 = vunpack.c.l.b16 %v201
    %v625 = vunpack.c.l.b16 %v202
    %v626 = vunpack.c.l.b16 %v203
    %v627 = vunpack.c.l.b16 %v204
    %v628 = vunpack.c.l.b16 %v205
    %v629 = vunpack.c.l.b16 %v206
    %v630 = vunpack.c.l.b16 %v207
    %v631 = vunpack.c.l.b16 %v208
    %v632 = vunpack.c.l.b16 %v209
    %v633 = vunpack.c.l.b16 %v210
    %v634 = vunpack.c.l.b16 %v211
    %v635 = vunpack.c.l.b16 %v212
    %v636 = vunpack.c.l.b16 %v213
    %v637 = vunpack.c.l.b16 %v214
    %v638 = vunpack.c.l.b16 %v215
    %v639 = vunpack.c.l.b16 %v216
    %v640 = vunpack.c.l.b16 %v217
    %v641 = vunpack.c.l.b16 %v218
    %v642 = vunpack.c.l.b16 %v219
    %v643 = vunpack.c.l.b16 %v220
    %v644 = vunpack.c.l.b16 %v221
    %v645 = vunpack.c.l.b16 %v222
    %v646 = vunpack.c.l.b16 %v223
    %v647 = vunpack.c.l.b16 %v224
    %v648 = vunpack.c.l.b16 %v225
    %v649 = vunpack.c.l.b16 %v226
    %v650 = vunpack.c.l.b16 %v227
    %v651 = vunpack.c.l.b16 %v228
    %v652 = vunpack.c.l.b16 %v229
    %v653 = vunpack.c.l.b16 %v230
    %v654 = vunpack.c.l.b16 %v231
    %v655 = vunpack.c.l.b16 %v232
    %v656 = vunpack.c.l.b16 %v233
    %v657 = vunpack.c.l.b16 %v234
    %v658 = vunpack.c.l.b16 %v235
    %v659 = vunpack.c.l.b16 %v236
    %v660 = vunpack.c.l.b16 %v237
    %v661 = vunpack.c.l.b16 %v238
    %v662 = vunpack.c.l.b16 %v239
    %v663 = vunpack.c.l.b16 %v240
    %v664 = vunpack.c.l.b16 %v241
    %v665 = vunpack.c.l.b16 %v242
    %v666 = vpack.c.b16 %v539, %v538
    %v667 = vpack.c.b16 %v541, %v540
    %v668 = vpack.c.b16 %v543, %v542
    %v669 = vpack.c.b16 %v545, %v544
    %v670 = vpack.c.b16 %v547, %v546
    %v671 = vpack.c.b16 %v549, %v548
    %v672 = vpack.c.b16 %v551, %v550
    %v673 = vpack.c.b16 %v553, %v552
    %v674 = vpack.c.b16 %v555, %v554
    %v675 = vpack.c.b16 %v557, %v556
    %v676 = vpack.c.b16 %v559, %v558
    %v677 = vpack.c.b16 %v561, %v560
    %v678 = vpack.c.b16 %v563, %v562
    %v679 = vpack.c.b16 %v565, %v564
    %v680 = vpack.c.b16 %v567, %v566
    %v681 = vpack.c.b16 %v569, %v568
    %v682 = vpack.c.b16 %v571, %v570
    %v683 = vpack.c.b16 %v573, %v572
    %v684 = vpack.c.b16 %v575, %v574
    %v685 = vpack.c.b16 %v577, %v576
    %v686 = vpack.c.b16 %v579, %v578
    %v687 = vpack.c.b16 %v581, %v580
    %v688 = vpack.c.b16 %v583, %v582
    %v689 = vpack.c.b16 %v585, %v584
    %v690 = vpack.c.b16 %v587, %v586
    %v691 = vpack.c.b16 %v589, %v588
    %v692 = vpack.c.b16 %v591, %v590
    %v693 = vpack.c.b16 %v593, %v592
    %v694 = vpack.c.b16 %v595, %v594
    %v695 = vpack.c.b16 %v597, %v596
    %v696 = vpack.c.b16 %v599, %v598
    %v697 = vpack.c.b16 %v601, %v600
    %v698 = vpack.c.b16 %v603, %v602
    %v699 = vpack.c.b16 %v605, %v604
    %v700 = vpack.c.b16 %v607, %v606
    %v701 = vpack.c.b16 %v609, %v608
    %v702 = vpack.c.b16 %v611, %v610
    %v703 = vpack.c.b16 %v613, %v612
    %v704 = vpack.c.b16 %v615, %v614
    %v705 = vpack.c.b16 %v617, %v616
    %v706 = vpack.c.b16 %v619, %v618
    %v707 = vpack.c.b16 %v621, %v620
    %v708 = vpack.c.b16 %v623, %v622
    %v709 = vpack.c.b16 %v625, %v624
    %v710 = vpack.c.b16 %v627, %v626
    %v711 = vpack.c.b16 %v629, %v628
    %v712 = vpack.c.b16 %v631, %v630
    %v713 = vpack.c.b16 %v633, %v632
    %v714 = vpack.c.b16 %v635, %v634
    %v715 = vpack.c.b16 %v637, %v636
    %v716 = vpack.c.b16 %v639, %v638
    %v717 = vpack.c.b16 %v641, %v640
    %v718 = vpack.c.b16 %v643, %v642
    %v719 = vpack.c.b16 %v645, %v644
    %v720 = vpack.c.b16 %v647, %v646
    %v721 = vpack.c.b16 %v649, %v648
    %v722 = vpack.c.b16 %v651, %v650
    %v723 = vpack.c.b16 %v653, %v652
    %v724 = vpack.c.b16 %v655, %v654
    %v725 = vpack.c.b16 %v657, %v656
    %v726 = vpack.c.b16 %v659, %v658
    %v727 = vpack.c.b16 %v661, %v660
    %v728 = vpack.c.b16 %v663, %v662
    %v729 = vpack.c.b16 %v665, %v664
    %794 = vmatprep.subr.bf16.mxu0 0
    %795 = vmatpush1.bf16.msra.mxu0 %v666
    %796 = vmatprep.subr.bf16.mxu0 0
    %797 = vmatpush1.bf16.msra.mxu0 %v667
    %798 = vmatprep.subr.bf16.mxu0 0
    %799 = vmatpush1.bf16.msra.mxu0 %v668
    %800 = vmatprep.subr.bf16.mxu0 0
    %801 = vmatpush1.bf16.msra.mxu0 %v669
    %802 = vmatprep.subr.bf16.mxu0 0
    %803 = vmatpush1.bf16.msra.mxu0 %v670
    %804 = vmatprep.subr.bf16.mxu0 0
    %805 = vmatpush1.bf16.msra.mxu0 %v671
    %806 = vmatprep.subr.bf16.mxu0 0
    %807 = vmatpush1.bf16.msra.mxu0 %v672
    %808 = vmatprep.subr.bf16.mxu0 0
    %809 = vmatpush1.bf16.msra.mxu0 %v673
    %810 = vmatprep.subr.bf16.mxu0 0
    %811 = vmatpush1.bf16.msra.mxu0 %v674
    %812 = vmatprep.subr.bf16.mxu0 0
    %813 = vmatpush1.bf16.msra.mxu0 %v675
    %814 = vmatprep.subr.bf16.mxu0 0
    %815 = vmatpush1.bf16.msra.mxu0 %v676
    %816 = vmatprep.subr.bf16.mxu0 0
    %817 = vmatpush1.bf16.msra.mxu0 %v677
    %818 = vmatprep.subr.bf16.mxu0 0
    %819 = vmatpush1.bf16.msra.mxu0 %v678
    %820 = vmatprep.subr.bf16.mxu0 0
    %821 = vmatpush1.bf16.msra.mxu0 %v679
    %822 = vmatprep.subr.bf16.mxu0 0
    %823 = vmatpush1.bf16.msra.mxu0 %v680
    %824 = vmatprep.subr.bf16.mxu0 0
    %825 = vmatpush1.bf16.msra.mxu0 %v681
    %826 = vmatprep.mubr.bf16.mxu0 %v347
    %827 = vmatmul.mubr.bf16.gmra.mrb[0].mxu0 %v346
    %v828 = vpop.f32.mrb[0].mxu0
    %v829 = vadd.f32 %v248, %v828
    %v830 = vpop.f32.mrb[0].mxu0
    %v831 = vpop.f32.mrb[0].mxu0
    %v832 = vadd.f32 %v248, %v831
    %v833 = vpop.f32.mrb[0].mxu0
    %834 = vmatprep.mubr.bf16.mxu0 %v355
    %835 = vmatmul.mubr.bf16.gmra.mrb[0].mxu0 %v354
    %v836 = vpop.f32.mrb[0].mxu0
    %v837 = vadd.f32 %v248, %v836
    %v838 = vpop.f32.mrb[0].mxu0
    %v839 = vpop.f32.mrb[0].mxu0
    %v840 = vadd.f32 %v248, %v839
    %v841 = vpop.f32.mrb[0].mxu0
    %842 = vmatprep.mubr.bf16.mxu0 %v363
    %843 = vmatmul.mubr.bf16.gmra.mrb[0].mxu0 %v362
    %v844 = vpop.f32.mrb[0].mxu0
    %v845 = vadd.f32 %v248, %v844
    %v846 = vpop.f32.mrb[0].mxu0
    %v847 = vpop.f32.mrb[0].mxu0
    %v848 = vadd.f32 %v248, %v847
    %v849 = vpop.f32.mrb[0].mxu0
    %850 = vmatprep.mubr.bf16.mxu0 %v371
    %851 = vmatmul.mubr.bf16.gmra.mrb[0].mxu0 %v370
    %v852 = vpop.f32.mrb[0].mxu0
    %v853 = vadd.f32 %v248, %v852
    %v854 = vpop.f32.mrb[0].mxu0
    %v855 = vpop.f32.mrb[0].mxu0
    %v856 = vadd.f32 %v248, %v855
    %v857 = vpop.f32.mrb[0].mxu0
    %858 = vdwg.mxu0
    %859 = vmatprep.subr.bf16.mxu0 0
    %860 = vmatpush1.bf16.msra.mxu0 %v682
    %861 = vmatprep.subr.bf16.mxu0 0
    %862 = vmatpush1.bf16.msra.mxu0 %v683
    %863 = vmatprep.subr.bf16.mxu0 0
    %864 = vmatpush1.bf16.msra.mxu0 %v684
    %865 = vmatprep.subr.bf16.mxu0 0
    %866 = vmatpush1.bf16.msra.mxu0 %v685
    %867 = vmatprep.subr.bf16.mxu0 0
    %868 = vmatpush1.bf16.msra.mxu0 %v686
    %869 = vmatprep.subr.bf16.mxu0 0
    %870 = vmatpush1.bf16.msra.mxu0 %v687
    %871 = vmatprep.subr.bf16.mxu0 0
    %872 = vmatpush1.bf16.msra.mxu0 %v688
    %873 = vmatprep.subr.bf16.mxu0 0
    %874 = vmatpush1.bf16.msra.mxu0 %v689
    %875 = vmatprep.subr.bf16.mxu0 0
    %876 = vmatpush1.bf16.msra.mxu0 %v690
    %877 = vmatprep.subr.bf16.mxu0 0
    %878 = vmatpush1.bf16.msra.mxu0 %v691
    %879 = vmatprep.subr.bf16.mxu0 0
    %880 = vmatpush1.bf16.msra.mxu0 %v692
    %881 = vmatprep.subr.bf16.mxu0 0
    %882 = vmatpush1.bf16.msra.mxu0 %v693
    %883 = vmatprep.subr.bf16.mxu0 0
    %884 = vmatpush1.bf16.msra.mxu0 %v694
    %885 = vmatprep.subr.bf16.mxu0 0
    %886 = vmatpush1.bf16.msra.mxu0 %v695
    %887 = vmatprep.subr.bf16.mxu0 0
    %888 = vmatpush1.bf16.msra.mxu0 %v696
    %889 = vmatprep.subr.bf16.mxu0 0
    %890 = vmatpush1.bf16.msra.mxu0 %v697
    %891 = vmatprep.mubr.bf16.mxu0 %v349
    %892 = vmatmul.mubr.bf16.gmra.mrb[0].mxu0 %v348
    %v893 = vpop.f32.mrb[0].mxu0
    %v894 = vadd.f32 %v829, %v893
    %v895 = vpop.f32.mrb[0].mxu0
    %v896 = vpop.f32.mrb[0].mxu0
    %v897 = vadd.f32 %v832, %v896
    %v898 = vpop.f32.mrb[0].mxu0
    %899 = vmatprep.mubr.bf16.mxu0 %v357
    %900 = vmatmul.mubr.bf16.gmra.mrb[0].mxu0 %v356
    %v901 = vpop.f32.mrb[0].mxu0
    %v902 = vadd.f32 %v837, %v901
    %v903 = vpop.f32.mrb[0].mxu0
    %v904 = vpop.f32.mrb[0].mxu0
    %v905 = vadd.f32 %v840, %v904
    %v906 = vpop.f32.mrb[0].mxu0
    %907 = vmatprep.mubr.bf16.mxu0 %v365
    %908 = vmatmul.mubr.bf16.gmra.mrb[0].mxu0 %v364
    %v909 = vpop.f32.mrb[0].mxu0
    %v910 = vadd.f32 %v845, %v909
    %v911 = vpop.f32.mrb[0].mxu0
    %v912 = vpop.f32.mrb[0].mxu0
    %v913 = vadd.f32 %v848, %v912
    %v914 = vpop.f32.mrb[0].mxu0
    %915 = vmatprep.mubr.bf16.mxu0 %v373
    %916 = vmatmul.mubr.bf16.gmra.mrb[0].mxu0 %v372
    %v917 = vpop.f32.mrb[0].mxu0
    %v918 = vadd.f32 %v853, %v917
    %v919 = vpop.f32.mrb[0].mxu0
    %v920 = vpop.f32.mrb[0].mxu0
    %v921 = vadd.f32 %v856, %v920
    %v922 = vpop.f32.mrb[0].mxu0
    %923 = vdwg.mxu0
    %924 = vmatprep.subr.bf16.mxu0 0
    %925 = vmatpush1.bf16.msra.mxu0 %v698
    %926 = vmatprep.subr.bf16.mxu0 0
    %927 = vmatpush1.bf16.msra.mxu0 %v699
    %928 = vmatprep.subr.bf16.mxu0 0
    %929 = vmatpush1.bf16.msra.mxu0 %v700
    %930 = vmatprep.subr.bf16.mxu0 0
    %931 = vmatpush1.bf16.msra.mxu0 %v701
    %932 = vmatprep.subr.bf16.mxu0 0
    %933 = vmatpush1.bf16.msra.mxu0 %v702
    %934 = vmatprep.subr.bf16.mxu0 0
    %935 = vmatpush1.bf16.msra.mxu0 %v703
    %936 = vmatprep.subr.bf16.mxu0 0
    %937 = vmatpush1.bf16.msra.mxu0 %v704
    %938 = vmatprep.subr.bf16.mxu0 0
    %939 = vmatpush1.bf16.msra.mxu0 %v705
    %940 = vmatprep.subr.bf16.mxu0 0
    %941 = vmatpush1.bf16.msra.mxu0 %v706
    %942 = vmatprep.subr.bf16.mxu0 0
    %943 = vmatpush1.bf16.msra.mxu0 %v707
    %944 = vmatprep.subr.bf16.mxu0 0
    %945 = vmatpush1.bf16.msra.mxu0 %v708
    %946 = vmatprep.subr.bf16.mxu0 0
    %947 = vmatpush1.bf16.msra.mxu0 %v709
    %948 = vmatprep.subr.bf16.mxu0 0
    %949 = vmatpush1.bf16.msra.mxu0 %v710
    %950 = vmatprep.subr.bf16.mxu0 0
    %951 = vmatpush1.bf16.msra.mxu0 %v711
    %952 = vmatprep.subr.bf16.mxu0 0
    %953 = vmatpush1.bf16.msra.mxu0 %v712
    %954 = vmatprep.subr.bf16.mxu0 0
    %955 = vmatpush1.bf16.msra.mxu0 %v713
    %956 = vmatprep.mubr.bf16.mxu0 %v351
    %957 = vmatmul.mubr.bf16.gmra.mrb[0].mxu0 %v350
    %v958 = vpop.f32.mrb[0].mxu0
    %v959 = vadd.f32 %v894, %v958
    %v960 = vpop.f32.mrb[0].mxu0
    %v961 = vpop.f32.mrb[0].mxu0
    %v962 = vadd.f32 %v897, %v961
    %v963 = vpop.f32.mrb[0].mxu0
    %964 = vmatprep.mubr.bf16.mxu0 %v359
    %965 = vmatmul.mubr.bf16.gmra.mrb[0].mxu0 %v358
    %v966 = vpop.f32.mrb[0].mxu0
    %v967 = vadd.f32 %v902, %v966
    %v968 = vpop.f32.mrb[0].mxu0
    %v969 = vpop.f32.mrb[0].mxu0
    %v970 = vadd.f32 %v905, %v969
    %v971 = vpop.f32.mrb[0].mxu0
    %972 = vmatprep.mubr.bf16.mxu0 %v367
    %973 = vmatmul.mubr.bf16.gmra.mrb[0].mxu0 %v366
    %v974 = vpop.f32.mrb[0].mxu0
    %v975 = vadd.f32 %v910, %v974
    %v976 = vpop.f32.mrb[0].mxu0
    %v977 = vpop.f32.mrb[0].mxu0
    %v978 = vadd.f32 %v913, %v977
    %v979 = vpop.f32.mrb[0].mxu0
    %980 = vmatprep.mubr.bf16.mxu0 %v375
    %981 = vmatmul.mubr.bf16.gmra.mrb[0].mxu0 %v374
    %v982 = vpop.f32.mrb[0].mxu0
    %v983 = vadd.f32 %v918, %v982
    %v984 = vpop.f32.mrb[0].mxu0
    %v985 = vpop.f32.mrb[0].mxu0
    %v986 = vadd.f32 %v921, %v985
    %v987 = vpop.f32.mrb[0].mxu0
    %988 = vdwg.mxu0
    %989 = vmatprep.subr.bf16.mxu0 0
    %990 = vmatpush1.bf16.msra.mxu0 %v714
    %991 = vmatprep.subr.bf16.mxu0 0
    %992 = vmatpush1.bf16.msra.mxu0 %v715
    %993 = vmatprep.subr.bf16.mxu0 0
    %994 = vmatpush1.bf16.msra.mxu0 %v716
    %995 = vmatprep.subr.bf16.mxu0 0
    %996 = vmatpush1.bf16.msra.mxu0 %v717
    %997 = vmatprep.subr.bf16.mxu0 0
    %998 = vmatpush1.bf16.msra.mxu0 %v718
    %999 = vmatprep.subr.bf16.mxu0 0
    %1000 = vmatpush1.bf16.msra.mxu0 %v719
    %1001 = vmatprep.subr.bf16.mxu0 0
    %1002 = vmatpush1.bf16.msra.mxu0 %v720
    %1003 = vmatprep.subr.bf16.mxu0 0
    %1004 = vmatpush1.bf16.msra.mxu0 %v721
    %1005 = vmatprep.subr.bf16.mxu0 0
    %1006 = vmatpush1.bf16.msra.mxu0 %v722
    %1007 = vmatprep.subr.bf16.mxu0 0
    %1008 = vmatpush1.bf16.msra.mxu0 %v723
    %1009 = vmatprep.subr.bf16.mxu0 0
    %1010 = vmatpush1.bf16.msra.mxu0 %v724
    %1011 = vmatprep.subr.bf16.mxu0 0
    %1012 = vmatpush1.bf16.msra.mxu0 %v725
    %1013 = vmatprep.subr.bf16.mxu0 0
    %1014 = vmatpush1.bf16.msra.mxu0 %v726
    %1015 = vmatprep.subr.bf16.mxu0 0
    %1016 = vmatpush1.bf16.msra.mxu0 %v727
    %1017 = vmatprep.subr.bf16.mxu0 0
    %1018 = vmatpush1.bf16.msra.mxu0 %v728
    %1019 = vmatprep.subr.bf16.mxu0 0
    %1020 = vmatpush1.bf16.msra.mxu0 %v729
    %1021 = vmatprep.mubr.bf16.mxu0 %v353
    %1022 = vmatmul.mubr.bf16.gmra.mrb[0].mxu0 %v352
    %v1023 = vpop.f32.mrb[0].mxu0
    %v1024 = vadd.f32 %v959, %v1023
    %v1025 = vpop.f32.mrb[0].mxu0
    %v1026 = vpop.f32.mrb[0].mxu0
    %v1027 = vadd.f32 %v962, %v1026
    %v1028 = vpop.f32.mrb[0].mxu0
    %1029 = vmatprep.mubr.bf16.mxu0 %v361
    %1030 = vmatmul.mubr.bf16.gmra.mrb[0].mxu0 %v360
    %v1031 = vpop.f32.mrb[0].mxu0
    %v1032 = vadd.f32 %v967, %v1031
    %v1033 = vpop.f32.mrb[0].mxu0
    %v1034 = vpop.f32.mrb[0].mxu0
    %v1035 = vadd.f32 %v970, %v1034
    %v1036 = vpop.f32.mrb[0].mxu0
    %1037 = vmatprep.mubr.bf16.mxu0 %v369
    %1038 = vmatmul.mubr.bf16.gmra.mrb[0].mxu0 %v368
    %v1039 = vpop.f32.mrb[0].mxu0
    %v1040 = vadd.f32 %v975, %v1039
    %v1041 = vpop.f32.mrb[0].mxu0
    %v1042 = vpop.f32.mrb[0].mxu0
    %v1043 = vadd.f32 %v978, %v1042
    %v1044 = vpop.f32.mrb[0].mxu0
    %1045 = vmatprep.mubr.bf16.mxu0 %v377
    %1046 = vmatmul.mubr.bf16.gmra.mrb[0].mxu0 %v376
    %v1047 = vpop.f32.mrb[0].mxu0
    %v1048 = vadd.f32 %v983, %v1047
    %v1049 = vpop.f32.mrb[0].mxu0
    %v1050 = vpop.f32.mrb[0].mxu0
    %v1051 = vadd.f32 %v986, %v1050
    %v1052 = vpop.f32.mrb[0].mxu0
    %1053 = vdwg.mxu0
    %v1054 = vld [vmem:[#allocation7] sm:$0xf]
    %v1055 = vld [vmem:[#allocation7 + $0x4] sm:$0xf]
    %v1056 = vld [vmem:[#allocation7 + $0x8] sm:$0xf]
    %v1057 = vld [vmem:[#allocation7 + $0xc] sm:$0xf]
    %v1058 = vld [vmem:[#allocation8] sm:$0xf]
    %v1059 = vld [vmem:[#allocation8 + $0x4] sm:$0xf]
    %v1060 = vld [vmem:[#allocation8 + $0x8] sm:$0xf]
    %v1061 = vld [vmem:[#allocation8 + $0xc] sm:$0xf]
    %v1062 = vld [vmem:[%s5] sm:$0xf]
    %v1063 = vld [vmem:[%s5 + $0x4] sm:$0xf]
    %v1064 = vld [vmem:[%s5 + $0x8] sm:$0xf]
    %v1065 = vld [vmem:[%s5 + $0xc] sm:$0xf]
    %v1066 = vld [vmem:[%s6] sm:$0x1]
    %v1071 = vunpack.c.l.b16 %v1054
    %v1072 = vunpack.c.l.b16 %v1055
    %v1073 = vunpack.c.l.b16 %v1056
    %v1074 = vunpack.c.l.b16 %v1057
    %v1075 = vpack.c.b16 %v1072, %v1071
    %v1076 = vpack.c.b16 %v1074, %v1073
    %vm1079 = vcmask 261120
    %v1081 = vsel %vm1079, 0, 0
    %1083 = vmatprep.subr.bf16.mxu0 0
    %1084 = vmatpush1.bf16.msra.mxu0 %v1075
    %1085 = vmatprep.subr.bf16.mxu0 0
    %1086 = vmatpush1.bf16.msra.mxu0 %v1076
    %1087 = vmatprep.subr.bf16.mxu0 0
    %1088 = vmatpush1.bf16.msra.mxu0 0
    %1089 = vmatprep.subr.bf16.mxu0 0
    %1090 = vmatpush1.bf16.msra.mxu0 0
    %1091 = vmatprep.subr.bf16.mxu0 0
    %1092 = vmatpush1.bf16.msra.mxu0 0
    %1093 = vmatprep.subr.bf16.mxu0 0
    %1094 = vmatpush1.bf16.msra.mxu0 0
    %1095 = vmatprep.subr.bf16.mxu0 0
    %1096 = vmatpush1.bf16.msra.mxu0 0
    %1097 = vmatprep.subr.bf16.mxu0 0
    %1098 = vmatpush1.bf16.msra.mxu0 0
    %1099 = vmatprep.subr.bf16.mxu0 0
    %1100 = vmatpush1.bf16.msra.mxu0 0
    %1101 = vmatprep.subr.bf16.mxu0 0
    %1102 = vmatpush1.bf16.msra.mxu0 0
    %1103 = vmatprep.subr.bf16.mxu0 0
    %1104 = vmatpush1.bf16.msra.mxu0 0
    %1105 = vmatprep.subr.bf16.mxu0 0
    %1106 = vmatpush1.bf16.msra.mxu0 0
    %1107 = vmatprep.subr.bf16.mxu0 0
    %1108 = vmatpush1.bf16.msra.mxu0 0
    %1109 = vmatprep.subr.bf16.mxu0 0
    %1110 = vmatpush1.bf16.msra.mxu0 0
    %1111 = vmatprep.subr.bf16.mxu0 0
    %1112 = vmatpush1.bf16.msra.mxu0 0
    %1113 = vmatprep.subr.bf16.mxu0 0
    %1114 = vmatpush1.bf16.msra.mxu0 0
    %1115 = vmatprep.mubr.bf16.mxu0 0
    %1116 = vmatmul.mubr.bf16.gmra.mrb[0].mxu0 %v1081
    %v1117 = vpop.f32.mrb[0].mxu0
    %v1118 = vadd.f32 %v1024, %v1117
    %v1119 = vpop.f32.mrb[0].mxu0
    %v1120 = vpop.f32.mrb[0].mxu0
    %v1121 = vpop.f32.mrb[0].mxu0
    %1122 = vdwg.mxu0
    %v1123 = vxor.u32 %v1118, 2147483648
    %v1124 = vmul.f32 %v1123, 1.442695
    %v1125 = vpow.pop %v1124
    %v1126 = vadd.f32 %v1125, 1.0
    %v1127 = vrcp.pop %v1126
    %v1128 = vmul.f32 1.0, %v1127
    %v1129 = vtanh.pop %v1118
    %v1130 = vmul.f32 %v1128, 0.0
    %1132 = vrot.lane.b32.xlu0 %v1129, 64
    %v1133 = vpop.permute.xlu0 %1132
    %v1135 = vmul.f32 %v1128, %v1133
    %1137 = vrot.lane.b32.xlu0 %v1135, 96
    %v1138 = vpop.permute.xlu0 %1137
    %v1140 = vadd.f32 %v1130, %v1138
    %v1141 = vpack.c.bf16 %v1130, %v1130
    %1143 = vrot.lane.b32.xlu0 %v1141, 64
    %v1144 = vpop.permute.xlu0 %1143
    %v1149 = vunpack.c.l.b16 %v1058
    %v1150 = vunpack.c.l.b16 %v1059
    %v1151 = vunpack.c.l.b16 %v1060
    %v1152 = vunpack.c.l.b16 %v1061
    %v1153 = vpack.c.b16 %v1150, %v1149
    %v1154 = vpack.c.b16 %v1152, %v1151
    %v1158 = vsel %vm1079, %v1144, 0
    %1160 = vmatprep.subr.bf16.mxu0 0
    %1161 = vmatpush1.bf16.msra.mxu0 %v1153
    %1162 = vmatprep.subr.bf16.mxu0 0
    %1163 = vmatpush1.bf16.msra.mxu0 %v1154
    %1164 = vmatprep.subr.bf16.mxu0 0
    %1165 = vmatpush1.bf16.msra.mxu0 0
    %1166 = vmatprep.subr.bf16.mxu0 0
    %1167 = vmatpush1.bf16.msra.mxu0 0
    %1168 = vmatprep.subr.bf16.mxu0 0
    %1169 = vmatpush1.bf16.msra.mxu0 0
    %1170 = vmatprep.subr.bf16.mxu0 0
    %1171 = vmatpush1.bf16.msra.mxu0 0
    %1172 = vmatprep.subr.bf16.mxu0 0
    %1173 = vmatpush1.bf16.msra.mxu0 0
    %1174 = vmatprep.subr.bf16.mxu0 0
    %1175 = vmatpush1.bf16.msra.mxu0 0
    %1176 = vmatprep.subr.bf16.mxu0 0
    %1177 = vmatpush1.bf16.msra.mxu0 0
    %1178 = vmatprep.subr.bf16.mxu0 0
    %1179 = vmatpush1.bf16.msra.mxu0 0
    %1180 = vmatprep.subr.bf16.mxu0 0
    %1181 = vmatpush1.bf16.msra.mxu0 0
    %1182 = vmatprep.subr.bf16.mxu0 0
    %1183 = vmatpush1.bf16.msra.mxu0 0
    %1184 = vmatprep.subr.bf16.mxu0 0
    %1185 = vmatpush1.bf16.msra.mxu0 0
    %1186 = vmatprep.subr.bf16.mxu0 0
    %1187 = vmatpush1.bf16.msra.mxu0 0
    %1188 = vmatprep.subr.bf16.mxu0 0
    %1189 = vmatpush1.bf16.msra.mxu0 0
    %1190 = vmatprep.subr.bf16.mxu0 0
    %1191 = vmatpush1.bf16.msra.mxu0 0
    %1192 = vmatprep.mubr.bf16.mxu0 0
    %1193 = vmatmul.mubr.bf16.gmra.mrb[0].mxu0 %v1158
    %v1194 = vpop.f32.mrb[0].mxu0
    %v1195 = vadd.f32 0.0, %v1194
    %v1196 = vpop.f32.mrb[0].mxu0
    %v1197 = vpop.f32.mrb[0].mxu0
    %v1198 = vpop.f32.mrb[0].mxu0
    %1199 = vdwg.mxu0
    %v1204 = vunpack.c.l.b16 %v1062
    %v1205 = vunpack.c.l.b16 %v1063
    %v1206 = vunpack.c.l.b16 %v1064
    %v1207 = vunpack.c.l.b16 %v1065
    %v1208 = vpack.c.b16 %v1205, %v1204
    %v1209 = vpack.c.b16 %v1207, %v1206
    %1212 = vmatprep.subr.bf16.mxu0 0
    %1213 = vmatpush1.bf16.msra.mxu0 %v1208
    %1214 = vmatprep.subr.bf16.mxu0 0
    %1215 = vmatpush1.bf16.msra.mxu0 %v1209
    %1216 = vmatprep.subr.bf16.mxu0 0
    %1217 = vmatpush1.bf16.msra.mxu0 0
    %1218 = vmatprep.subr.bf16.mxu0 0
    %1219 = vmatpush1.bf16.msra.mxu0 0
    %1220 = vmatprep.subr.bf16.mxu0 0
    %1221 = vmatpush1.bf16.msra.mxu0 0
    %1222 = vmatprep.subr.bf16.mxu0 0
    %1223 = vmatpush1.bf16.msra.mxu0 0
    %1224 = vmatprep.subr.bf16.mxu0 0
    %1225 = vmatpush1.bf16.msra.mxu0 0
    %1226 = vmatprep.subr.bf16.mxu0 0
    %1227 = vmatpush1.bf16.msra.mxu0 0
    %1228 = vmatprep.subr.bf16.mxu0 0
    %1229 = vmatpush1.bf16.msra.mxu0 0
    %1230 = vmatprep.subr.bf16.mxu0 0
    %1231 = vmatpush1.bf16.msra.mxu0 0
    %1232 = vmatprep.subr.bf16.mxu0 0
    %1233 = vmatpush1.bf16.msra.mxu0 0
    %1234 = vmatprep.subr.bf16.mxu0 0
    %1235 = vmatpush1.bf16.msra.mxu0 0
    %1236 = vmatprep.subr.bf16.mxu0 0
    %1237 = vmatpush1.bf16.msra.mxu0 0
    %1238 = vmatprep.subr.bf16.mxu0 0
    %1239 = vmatpush1.bf16.msra.mxu0 0
    %1240 = vmatprep.subr.bf16.mxu0 0
    %1241 = vmatpush1.bf16.msra.mxu0 0
    %1242 = vmatprep.subr.bf16.mxu0 0
    %1243 = vmatpush1.bf16.msra.mxu0 0
    %1244 = vmatprep.mubr.bf16.mxu0 0
    %1245 = vmatmul.mubr.bf16.gmra.mrb[0].mxu0 %v1081
    %v1246 = vpop.f32.mrb[0].mxu0
    %v1247 = vadd.f32 %v1195, %v1246
    %v1248 = vpop.f32.mrb[0].mxu0
    %v1249 = vpop.f32.mrb[0].mxu0
    %v1250 = vpop.f32.mrb[0].mxu0
    %1251 = vdwg.mxu0
    %v1253 = vlaneseq
    %v1254 = vshrl.u32 %v1253, 7
    %v1255 = vsub.s32 0, %v1254
    %v1256 = vrot.slane %v1066, %v1255
    %v1258 = vadd.f32 %v1247, %v1256
    %v1259 = vxor.u32 %v1258, 2147483648
    %v1260 = vmul.f32 %v1259, 1.442695
    %v1261 = vpow.pop %v1260
    %v1262 = vadd.f32 %v1261, 1.0
    %v1263 = vrcp.pop %v1262
    %v1264 = vmul.f32 1.0, %v1263
    %v1265 = vtanh.pop %v1258
    %v1266 = vmul.f32 %v1264, 0.0
    %1268 = vrot.lane.b32.xlu0 %v1265, 64
    %v1269 = vpop.permute.xlu0 %1268
    %v1271 = vmul.f32 %v1264, %v1269
    %1273 = vrot.lane.b32.xlu0 %v1271, 96
    %v1274 = vpop.permute.xlu0 %1273
    %v1276 = vadd.f32 %v1266, %v1274
    %1277 = vmatprep.subr.bf16.mxu0 0
    %1278 = vmatpush1.bf16.msra.mxu0 %v1075
    %1279 = vmatprep.subr.bf16.mxu0 0
    %1280 = vmatpush1.bf16.msra.mxu0 %v1076
    %1281 = vmatprep.subr.bf16.mxu0 0
    %1282 = vmatpush1.bf16.msra.mxu0 0
    %1283 = vmatprep.subr.bf16.mxu0 0
    %1284 = vmatpush1.bf16.msra.mxu0 0
    %1285 = vmatprep.subr.bf16.mxu0 0
    %1286 = vmatpush1.bf16.msra.mxu0 0
    %1287 = vmatprep.subr.bf16.mxu0 0
    %1288 = vmatpush1.bf16.msra.mxu0 0
    %1289 = vmatprep.subr.bf16.mxu0 0
    %1290 = vmatpush1.bf16.msra.mxu0 0
    %1291 = vmatprep.subr.bf16.mxu0 0
    %1292 = vmatpush1.bf16.msra.mxu0 0
    %1293 = vmatprep.subr.bf16.mxu0 0
    %1294 = vmatpush1.bf16.msra.mxu0 0
    %1295 = vmatprep.subr.bf16.mxu0 0
    %1296 = vmatpush1.bf16.msra.mxu0 0
    %1297 = vmatprep.subr.bf16.mxu0 0
    %1298 = vmatpush1.bf16.msra.mxu0 0
    %1299 = vmatprep.subr.bf16.mxu0 0
    %1300 = vmatpush1.bf16.msra.mxu0 0
    %1301 = vmatprep.subr.bf16.mxu0 0
    %1302 = vmatpush1.bf16.msra.mxu0 0
    %1303 = vmatprep.subr.bf16.mxu0 0
    %1304 = vmatpush1.bf16.msra.mxu0 0
    %1305 = vmatprep.subr.bf16.mxu0 0
    %1306 = vmatpush1.bf16.msra.mxu0 0
    %1307 = vmatprep.subr.bf16.mxu0 0
    %1308 = vmatpush1.bf16.msra.mxu0 0
    %1309 = vmatprep.mubr.bf16.mxu0 0
    %1310 = vmatmul.mubr.bf16.gmra.mrb[0].mxu0 %v1158
    %v1311 = vpop.f32.mrb[0].mxu0
    %v1312 = vadd.f32 %v1027, %v1311
    %v1313 = vpop.f32.mrb[0].mxu0
    %v1314 = vpop.f32.mrb[0].mxu0
    %v1315 = vpop.f32.mrb[0].mxu0
    %1316 = vdwg.mxu0
    %v1317 = vxor.u32 %v1312, 2147483648
    %v1318 = vmul.f32 %v1317, 1.442695
    %v1319 = vpow.pop %v1318
    %v1320 = vadd.f32 %v1319, 1.0
    %v1321 = vrcp.pop %v1320
    %v1322 = vmul.f32 1.0, %v1321
    %v1323 = vtanh.pop %v1312
    %v1324 = vmul.f32 %v1322, %v1140
    %1326 = vrot.lane.b32.xlu0 %v1323, 64
    %v1327 = vpop.permute.xlu0 %1326
    %v1329 = vmul.f32 %v1322, %v1327
    %1331 = vrot.lane.b32.xlu0 %v1329, 96
    %v1332 = vpop.permute.xlu0 %1331
    %v1334 = vadd.f32 %v1324, %v1332
    %v1335 = vtanh.pop %v1140
    %1337 = vrot.lane.b32.xlu0 %v1322, 64
    %v1338 = vpop.permute.xlu0 %1337
    %v1340 = vmul.f32 %v1335, %v1338
    %v1341 = vpack.c.bf16 %v1266, %v1266
    %v1342 = vpack.c.bf16 %v1340, %v1340
    %v1344 = vsel %vm1079, %v1342, 0
    %1346 = vmatprep.subr.bf16.mxu0 0
    %1347 = vmatpush1.bf16.msra.mxu0 %v1153
    %1348 = vmatprep.subr.bf16.mxu0 0
    %1349 = vmatpush1.bf16.msra.mxu0 %v1154
    %1350 = vmatprep.subr.bf16.mxu0 0
    %1351 = vmatpush1.bf16.msra.mxu0 0
    %1352 = vmatprep.subr.bf16.mxu0 0
    %1353 = vmatpush1.bf16.msra.mxu0 0
    %1354 = vmatprep.subr.bf16.mxu0 0
    %1355 = vmatpush1.bf16.msra.mxu0 0
    %1356 = vmatprep.subr.bf16.mxu0 0
    %1357 = vmatpush1.bf16.msra.mxu0 0
    %1358 = vmatprep.subr.bf16.mxu0 0
    %1359 = vmatpush1.bf16.msra.mxu0 0
    %1360 = vmatprep.subr.bf16.mxu0 0
    %1361 = vmatpush1.bf16.msra.mxu0 0
    %1362 = vmatprep.subr.bf16.mxu0 0
    %1363 = vmatpush1.bf16.msra.mxu0 0
    %1364 = vmatprep.subr.bf16.mxu0 0
    %1365 = vmatpush1.bf16.msra.mxu0 0
    %1366 = vmatprep.subr.bf16.mxu0 0
    %1367 = vmatpush1.bf16.msra.mxu0 0
    %1368 = vmatprep.subr.bf16.mxu0 0
    %1369 = vmatpush1.bf16.msra.mxu0 0
    %1370 = vmatprep.subr.bf16.mxu0 0
    %1371 = vmatpush1.bf16.msra.mxu0 0
    %1372 = vmatprep.subr.bf16.mxu0 0
    %1373 = vmatpush1.bf16.msra.mxu0 0
    %1374 = vmatprep.subr.bf16.mxu0 0
    %1375 = vmatpush1.bf16.msra.mxu0 0
    %1376 = vmatprep.subr.bf16.mxu0 0
    %1377 = vmatpush1.bf16.msra.mxu0 0
    %1378 = vmatprep.mubr.bf16.mxu0 0
    %1379 = vmatmul.mubr.bf16.gmra.mrb[0].mxu0 %v1344
    %v1380 = vpop.f32.mrb[0].mxu0
    %v1381 = vadd.f32 0.0, %v1380
    %v1382 = vpop.f32.mrb[0].mxu0
    %v1383 = vpop.f32.mrb[0].mxu0
    %v1384 = vpop.f32.mrb[0].mxu0
    %1385 = vdwg.mxu0
    %1387 = vrot.lane.b32.xlu0 %v1341, 64
    %v1388 = vpop.permute.xlu0 %1387
    %v1390 = vsel %vm1079, %v1388, 0
    %1392 = vmatprep.subr.bf16.mxu0 0
    %1393 = vmatpush1.bf16.msra.mxu0 %v1208
    %1394 = vmatprep.subr.bf16.mxu0 0
    %1395 = vmatpush1.bf16.msra.mxu0 %v1209
    %1396 = vmatprep.subr.bf16.mxu0 0
    %1397 = vmatpush1.bf16.msra.mxu0 0
    %1398 = vmatprep.subr.bf16.mxu0 0
    %1399 = vmatpush1.bf16.msra.mxu0 0
    %1400 = vmatprep.subr.bf16.mxu0 0
    %1401 = vmatpush1.bf16.msra.mxu0 0
    %1402 = vmatprep.subr.bf16.mxu0 0
    %1403 = vmatpush1.bf16.msra.mxu0 0
    %1404 = vmatprep.subr.bf16.mxu0 0
    %1405 = vmatpush1.bf16.msra.mxu0 0
    %1406 = vmatprep.subr.bf16.mxu0 0
    %1407 = vmatpush1.bf16.msra.mxu0 0
    %1408 = vmatprep.subr.bf16.mxu0 0
    %1409 = vmatpush1.bf16.msra.mxu0 0
    %1410 = vmatprep.subr.bf16.mxu0 0
    %1411 = vmatpush1.bf16.msra.mxu0 0
    %1412 = vmatprep.subr.bf16.mxu0 0
    %1413 = vmatpush1.bf16.msra.mxu0 0
    %1414 = vmatprep.subr.bf16.mxu0 0
    %1415 = vmatpush1.bf16.msra.mxu0 0
    %1416 = vmatprep.subr.bf16.mxu0 0
    %1417 = vmatpush1.bf16.msra.mxu0 0
    %1418 = vmatprep.subr.bf16.mxu0 0
    %1419 = vmatpush1.bf16.msra.mxu0 0
    %1420 = vmatprep.subr.bf16.mxu0 0
    %1421 = vmatpush1.bf16.msra.mxu0 0
    %1422 = vmatprep.subr.bf16.mxu0 0
    %1423 = vmatpush1.bf16.msra.mxu0 0
    %1424 = vmatprep.mubr.bf16.mxu0 0
    %1425 = vmatmul.mubr.bf16.gmra.mrb[0].mxu0 %v1390
    %v1426 = vpop.f32.mrb[0].mxu0
    %v1427 = vadd.f32 %v1381, %v1426
    %v1428 = vpop.f32.mrb[0].mxu0
    %v1429 = vpop.f32.mrb[0].mxu0
    %v1430 = vpop.f32.mrb[0].mxu0
    %1431 = vdwg.mxu0
    %v1432 = vadd.f32 %v1427, %v1256
    %v1433 = vxor.u32 %v1432, 2147483648
    %v1434 = vmul.f32 %v1433, 1.442695
    %v1435 = vpow.pop %v1434
    %v1436 = vadd.f32 %v1435, 1.0
    %v1437 = vrcp.pop %v1436
    %v1438 = vmul.f32 1.0, %v1437
    %v1439 = vtanh.pop %v1432
    %v1440 = vmul.f32 %v1438, %v1276
    %1442 = vrot.lane.b32.xlu0 %v1439, 64
    %v1443 = vpop.permute.xlu0 %1442
    %v1445 = vmul.f32 %v1438, %v1443
    %1447 = vrot.lane.b32.xlu0 %v1445, 96
    %v1448 = vpop.permute.xlu0 %1447
    %v1450 = vadd.f32 %v1440, %v1448
    %v1451 = vtanh.pop %v1276
    %1453 = vrot.lane.b32.xlu0 %v1438, 64
    %v1454 = vpop.permute.xlu0 %1453
    %v1456 = vmul.f32 %v1451, %v1454
    %1457 = vmatprep.subr.bf16.mxu0 0
    %1458 = vmatpush1.bf16.msra.mxu0 %v1075
    %1459 = vmatprep.subr.bf16.mxu0 0
    %1460 = vmatpush1.bf16.msra.mxu0 %v1076
    %1461 = vmatprep.subr.bf16.mxu0 0
    %1462 = vmatpush1.bf16.msra.mxu0 0
    %1463 = vmatprep.subr.bf16.mxu0 0
    %1464 = vmatpush1.bf16.msra.mxu0 0
    %1465 = vmatprep.subr.bf16.mxu0 0
    %1466 = vmatpush1.bf16.msra.mxu0 0
    %1467 = vmatprep.subr.bf16.mxu0 0
    %1468 = vmatpush1.bf16.msra.mxu0 0
    %1469 = vmatprep.subr.bf16.mxu0 0
    %1470 = vmatpush1.bf16.msra.mxu0 0
    %1471 = vmatprep.subr.bf16.mxu0 0
    %1472 = vmatpush1.bf16.msra.mxu0 0
    %1473 = vmatprep.subr.bf16.mxu0 0
    %1474 = vmatpush1.bf16.msra.mxu0 0
    %1475 = vmatprep.subr.bf16.mxu0 0
    %1476 = vmatpush1.bf16.msra.mxu0 0
    %1477 = vmatprep.subr.bf16.mxu0 0
    %1478 = vmatpush1.bf16.msra.mxu0 0
    %1479 = vmatprep.subr.bf16.mxu0 0
    %1480 = vmatpush1.bf16.msra.mxu0 0
    %1481 = vmatprep.subr.bf16.mxu0 0
    %1482 = vmatpush1.bf16.msra.mxu0 0
    %1483 = vmatprep.subr.bf16.mxu0 0
    %1484 = vmatpush1.bf16.msra.mxu0 0
    %1485 = vmatprep.subr.bf16.mxu0 0
    %1486 = vmatpush1.bf16.msra.mxu0 0
    %1487 = vmatprep.subr.bf16.mxu0 0
    %1488 = vmatpush1.bf16.msra.mxu0 0
    %1489 = vmatprep.mubr.bf16.mxu0 0
    %1490 = vmatmul.mubr.bf16.gmra.mrb[0].mxu0 %v1344
    %v1491 = vpop.f32.mrb[0].mxu0
    %v1492 = vadd.f32 %v1032, %v1491
    %v1493 = vpop.f32.mrb[0].mxu0
    %v1494 = vpop.f32.mrb[0].mxu0
    %v1495 = vpop.f32.mrb[0].mxu0
    %1496 = vdwg.mxu0
    %v1497 = vxor.u32 %v1492, 2147483648
    %v1498 = vmul.f32 %v1497, 1.442695
    %v1499 = vpow.pop %v1498
    %v1500 = vadd.f32 %v1499, 1.0
    %v1501 = vrcp.pop %v1500
    %v1502 = vmul.f32 1.0, %v1501
    %v1503 = vtanh.pop %v1492
    %v1504 = vmul.f32 %v1502, %v1334
    %1506 = vrot.lane.b32.xlu0 %v1503, 64
    %v1507 = vpop.permute.xlu0 %1506
    %v1509 = vmul.f32 %v1502, %v1507
    %1511 = vrot.lane.b32.xlu0 %v1509, 96
    %v1512 = vpop.permute.xlu0 %1511
    %v1514 = vadd.f32 %v1504, %v1512
    %v1515 = vtanh.pop %v1334
    %1517 = vrot.lane.b32.xlu0 %v1502, 64
    %v1518 = vpop.permute.xlu0 %1517
    %v1520 = vmul.f32 %v1515, %v1518
    %v1521 = vpack.c.bf16 %v1456, %v1456
    %v1522 = vpack.c.bf16 %v1520, %v1520
    %v1524 = vsel %vm1079, %v1522, 0
    %1526 = vmatprep.subr.bf16.mxu0 0
    %1527 = vmatpush1.bf16.msra.mxu0 %v1153
    %1528 = vmatprep.subr.bf16.mxu0 0
    %1529 = vmatpush1.bf16.msra.mxu0 %v1154
    %1530 = vmatprep.subr.bf16.mxu0 0
    %1531 = vmatpush1.bf16.msra.mxu0 0
    %1532 = vmatprep.subr.bf16.mxu0 0
    %1533 = vmatpush1.bf16.msra.mxu0 0
    %1534 = vmatprep.subr.bf16.mxu0 0
    %1535 = vmatpush1.bf16.msra.mxu0 0
    %1536 = vmatprep.subr.bf16.mxu0 0
    %1537 = vmatpush1.bf16.msra.mxu0 0
    %1538 = vmatprep.subr.bf16.mxu0 0
    %1539 = vmatpush1.bf16.msra.mxu0 0
    %1540 = vmatprep.subr.bf16.mxu0 0
    %1541 = vmatpush1.bf16.msra.mxu0 0
    %1542 = vmatprep.subr.bf16.mxu0 0
    %1543 = vmatpush1.bf16.msra.mxu0 0
    %1544 = vmatprep.subr.bf16.mxu0 0
    %1545 = vmatpush1.bf16.msra.mxu0 0
    %1546 = vmatprep.subr.bf16.mxu0 0
    %1547 = vmatpush1.bf16.msra.mxu0 0
    %1548 = vmatprep.subr.bf16.mxu0 0
    %1549 = vmatpush1.bf16.msra.mxu0 0
    %1550 = vmatprep.subr.bf16.mxu0 0
    %1551 = vmatpush1.bf16.msra.mxu0 0
    %1552 = vmatprep.subr.bf16.mxu0 0
    %1553 = vmatpush1.bf16.msra.mxu0 0
    %1554 = vmatprep.subr.bf16.mxu0 0
    %1555 = vmatpush1.bf16.msra.mxu0 0
    %1556 = vmatprep.subr.bf16.mxu0 0
    %1557 = vmatpush1.bf16.msra.mxu0 0
    %1558 = vmatprep.mubr.bf16.mxu0 0
    %1559 = vmatmul.mubr.bf16.gmra.mrb[0].mxu0 %v1524
    %v1560 = vpop.f32.mrb[0].mxu0
    %v1561 = vadd.f32 0.0, %v1560
    %v1562 = vpop.f32.mrb[0].mxu0
    %v1563 = vpop.f32.mrb[0].mxu0
    %v1564 = vpop.f32.mrb[0].mxu0
    %1565 = vdwg.mxu0
    %v1567 = vsel %vm1079, %v1521, 0
    %1569 = vmatprep.subr.bf16.mxu0 0
    %1570 = vmatpush1.bf16.msra.mxu0 %v1208
    %1571 = vmatprep.subr.bf16.mxu0 0
    %1572 = vmatpush1.bf16.msra.mxu0 %v1209
    %1573 = vmatprep.subr.bf16.mxu0 0
    %1574 = vmatpush1.bf16.msra.mxu0 0
    %1575 = vmatprep.subr.bf16.mxu0 0
    %1576 = vmatpush1.bf16.msra.mxu0 0
    %1577 = vmatprep.subr.bf16.mxu0 0
    %1578 = vmatpush1.bf16.msra.mxu0 0
    %1579 = vmatprep.subr.bf16.mxu0 0
    %1580 = vmatpush1.bf16.msra.mxu0 0
    %1581 = vmatprep.subr.bf16.mxu0 0
    %1582 = vmatpush1.bf16.msra.mxu0 0
    %1583 = vmatprep.subr.bf16.mxu0 0
    %1584 = vmatpush1.bf16.msra.mxu0 0
    %1585 = vmatprep.subr.bf16.mxu0 0
    %1586 = vmatpush1.bf16.msra.mxu0 0
    %1587 = vmatprep.subr.bf16.mxu0 0
    %1588 = vmatpush1.bf16.msra.mxu0 0
    %1589 = vmatprep.subr.bf16.mxu0 0
    %1590 = vmatpush1.bf16.msra.mxu0 0
    %1591 = vmatprep.subr.bf16.mxu0 0
    %1592 = vmatpush1.bf16.msra.mxu0 0
    %1593 = vmatprep.subr.bf16.mxu0 0
    %1594 = vmatpush1.bf16.msra.mxu0 0
    %1595 = vmatprep.subr.bf16.mxu0 0
    %1596 = vmatpush1.bf16.msra.mxu0 0
    %1597 = vmatprep.subr.bf16.mxu0 0
    %1598 = vmatpush1.bf16.msra.mxu0 0
    %1599 = vmatprep.subr.bf16.mxu0 0
    %1600 = vmatpush1.bf16.msra.mxu0 0
    %1601 = vmatprep.mubr.bf16.mxu0 0
    %1602 = vmatmul.mubr.bf16.gmra.mrb[0].mxu0 %v1567
    %v1603 = vpop.f32.mrb[0].mxu0
    %v1604 = vadd.f32 %v1561, %v1603
    %v1605 = vpop.f32.mrb[0].mxu0
    %v1606 = vpop.f32.mrb[0].mxu0
    %v1607 = vpop.f32.mrb[0].mxu0
    %1608 = vdwg.mxu0
    %v1609 = vadd.f32 %v1604, %v1256
    %v1610 = vxor.u32 %v1609, 2147483648
    %v1611 = vmul.f32 %v1610, 1.442695
    %v1612 = vpow.pop %v1611
    %v1613 = vadd.f32 %v1612, 1.0
    %v1614 = vrcp.pop %v1613
    %v1615 = vmul.f32 1.0, %v1614
    %v1616 = vtanh.pop %v1609
    %v1617 = vmul.f32 %v1615, %v1450
    %1619 = vrot.lane.b32.xlu0 %v1616, 64
    %v1620 = vpop.permute.xlu0 %1619
    %v1622 = vmul.f32 %v1615, %v1620
    %1624 = vrot.lane.b32.xlu0 %v1622, 96
    %v1625 = vpop.permute.xlu0 %1624
    %v1627 = vadd.f32 %v1617, %v1625
    %v1628 = vtanh.pop %v1450
    %1630 = vrot.lane.b32.xlu0 %v1615, 64
    %v1631 = vpop.permute.xlu0 %1630
    %v1633 = vmul.f32 %v1628, %v1631
    %1634 = vmatprep.subr.bf16.mxu0 0
    %1635 = vmatpush1.bf16.msra.mxu0 %v1075
    %1636 = vmatprep.subr.bf16.mxu0 0
    %1637 = vmatpush1.bf16.msra.mxu0 %v1076
    %1638 = vmatprep.subr.bf16.mxu0 0
    %1639 = vmatpush1.bf16.msra.mxu0 0
    %1640 = vmatprep.subr.bf16.mxu0 0
    %1641 = vmatpush1.bf16.msra.mxu0 0
    %1642 = vmatprep.subr.bf16.mxu0 0
    %1643 = vmatpush1.bf16.msra.mxu0 0
    %1644 = vmatprep.subr.bf16.mxu0 0
    %1645 = vmatpush1.bf16.msra.mxu0 0
    %1646 = vmatprep.subr.bf16.mxu0 0
    %1647 = vmatpush1.bf16.msra.mxu0 0
    %1648 = vmatprep.subr.bf16.mxu0 0
    %1649 = vmatpush1.bf16.msra.mxu0 0
    %1650 = vmatprep.subr.bf16.mxu0 0
    %1651 = vmatpush1.bf16.msra.mxu0 0
    %1652 = vmatprep.subr.bf16.mxu0 0
    %1653 = vmatpush1.bf16.msra.mxu0 0
    %1654 = vmatprep.subr.bf16.mxu0 0
    %1655 = vmatpush1.bf16.msra.mxu0 0
    %1656 = vmatprep.subr.bf16.mxu0 0
    %1657 = vmatpush1.bf16.msra.mxu0 0
    %1658 = vmatprep.subr.bf16.mxu0 0
    %1659 = vmatpush1.bf16.msra.mxu0 0
    %1660 = vmatprep.subr.bf16.mxu0 0
    %1661 = vmatpush1.bf16.msra.mxu0 0
    %1662 = vmatprep.subr.bf16.mxu0 0
    %1663 = vmatpush1.bf16.msra.mxu0 0
    %1664 = vmatprep.subr.bf16.mxu0 0
    %1665 = vmatpush1.bf16.msra.mxu0 0
    %1666 = vmatprep.mubr.bf16.mxu0 0
    %1667 = vmatmul.mubr.bf16.gmra.mrb[0].mxu0 %v1524
    %v1668 = vpop.f32.mrb[0].mxu0
    %v1669 = vadd.f32 %v1035, %v1668
    %v1670 = vpop.f32.mrb[0].mxu0
    %v1671 = vpop.f32.mrb[0].mxu0
    %v1672 = vpop.f32.mrb[0].mxu0
    %1673 = vdwg.mxu0
    %v1674 = vxor.u32 %v1669, 2147483648
    %v1675 = vmul.f32 %v1674, 1.442695
    %v1676 = vpow.pop %v1675
    %v1677 = vadd.f32 %v1676, 1.0
    %v1678 = vrcp.pop %v1677
    %v1679 = vmul.f32 1.0, %v1678
    %v1680 = vtanh.pop %v1669
    %v1681 = vmul.f32 %v1679, %v1514
    %1683 = vrot.lane.b32.xlu0 %v1680, 64
    %v1684 = vpop.permute.xlu0 %1683
    %v1686 = vmul.f32 %v1679, %v1684
    %1688 = vrot.lane.b32.xlu0 %v1686, 96
    %v1689 = vpop.permute.xlu0 %1688
    %v1691 = vadd.f32 %v1681, %v1689
    %v1692 = vtanh.pop %v1514
    %1694 = vrot.lane.b32.xlu0 %v1679, 64
    %v1695 = vpop.permute.xlu0 %1694
    %v1697 = vmul.f32 %v1692, %v1695
    %v1698 = vpack.c.bf16 %v1633, %v1633
    %v1699 = vpack.c.bf16 %v1697, %v1697
    %v1701 = vsel %vm1079, %v1699, 0
    %1703 = vmatprep.subr.bf16.mxu0 0
    %1704 = vmatpush1.bf16.msra.mxu0 %v1153
    %1705 = vmatprep.subr.bf16.mxu0 0
    %1706 = vmatpush1.bf16.msra.mxu0 %v1154
    %1707 = vmatprep.subr.bf16.mxu0 0
    %1708 = vmatpush1.bf16.msra.mxu0 0
    %1709 = vmatprep.subr.bf16.mxu0 0
    %1710 = vmatpush1.bf16.msra.mxu0 0
    %1711 = vmatprep.subr.bf16.mxu0 0
    %1712 = vmatpush1.bf16.msra.mxu0 0
    %1713 = vmatprep.subr.bf16.mxu0 0
    %1714 = vmatpush1.bf16.msra.mxu0 0
    %1715 = vmatprep.subr.bf16.mxu0 0
    %1716 = vmatpush1.bf16.msra.mxu0 0
    %1717 = vmatprep.subr.bf16.mxu0 0
    %1718 = vmatpush1.bf16.msra.mxu0 0
    %1719 = vmatprep.subr.bf16.mxu0 0
    %1720 = vmatpush1.bf16.msra.mxu0 0
    %1721 = vmatprep.subr.bf16.mxu0 0
    %1722 = vmatpush1.bf16.msra.mxu0 0
    %1723 = vmatprep.subr.bf16.mxu0 0
    %1724 = vmatpush1.bf16.msra.mxu0 0
    %1725 = vmatprep.subr.bf16.mxu0 0
    %1726 = vmatpush1.bf16.msra.mxu0 0
    %1727 = vmatprep.subr.bf16.mxu0 0
    %1728 = vmatpush1.bf16.msra.mxu0 0
    %1729 = vmatprep.subr.bf16.mxu0 0
    %1730 = vmatpush1.bf16.msra.mxu0 0
    %1731 = vmatprep.subr.bf16.mxu0 0
    %1732 = vmatpush1.bf16.msra.mxu0 0
    %1733 = vmatprep.subr.bf16.mxu0 0
    %1734 = vmatpush1.bf16.msra.mxu0 0
    %1735 = vmatprep.mubr.bf16.mxu0 0
    %1736 = vmatmul.mubr.bf16.gmra.mrb[0].mxu0 %v1701
    %v1737 = vpop.f32.mrb[0].mxu0
    %v1738 = vadd.f32 0.0, %v1737
    %v1739 = vpop.f32.mrb[0].mxu0
    %v1740 = vpop.f32.mrb[0].mxu0
    %v1741 = vpop.f32.mrb[0].mxu0
    %1742 = vdwg.mxu0
    %v1744 = vsel %vm1079, %v1698, 0
    %1746 = vmatprep.subr.bf16.mxu0 0
    %1747 = vmatpush1.bf16.msra.mxu0 %v1208
    %1748 = vmatprep.subr.bf16.mxu0 0
    %1749 = vmatpush1.bf16.msra.mxu0 %v1209
    %1750 = vmatprep.subr.bf16.mxu0 0
    %1751 = vmatpush1.bf16.msra.mxu0 0
    %1752 = vmatprep.subr.bf16.mxu0 0
    %1753 = vmatpush1.bf16.msra.mxu0 0
    %1754 = vmatprep.subr.bf16.mxu0 0
    %1755 = vmatpush1.bf16.msra.mxu0 0
    %1756 = vmatprep.subr.bf16.mxu0 0
    %1757 = vmatpush1.bf16.msra.mxu0 0
    %1758 = vmatprep.subr.bf16.mxu0 0
    %1759 = vmatpush1.bf16.msra.mxu0 0
    %1760 = vmatprep.subr.bf16.mxu0 0
    %1761 = vmatpush1.bf16.msra.mxu0 0
    %1762 = vmatprep.subr.bf16.mxu0 0
    %1763 = vmatpush1.bf16.msra.mxu0 0
    %1764 = vmatprep.subr.bf16.mxu0 0
    %1765 = vmatpush1.bf16.msra.mxu0 0
    %1766 = vmatprep.subr.bf16.mxu0 0
    %1767 = vmatpush1.bf16.msra.mxu0 0
    %1768 = vmatprep.subr.bf16.mxu0 0
    %1769 = vmatpush1.bf16.msra.mxu0 0
    %1770 = vmatprep.subr.bf16.mxu0 0
    %1771 = vmatpush1.bf16.msra.mxu0 0
    %1772 = vmatprep.subr.bf16.mxu0 0
    %1773 = vmatpush1.bf16.msra.mxu0 0
    %1774 = vmatprep.subr.bf16.mxu0 0
    %1775 = vmatpush1.bf16.msra.mxu0 0
    %1776 = vmatprep.subr.bf16.mxu0 0
    %1777 = vmatpush1.bf16.msra.mxu0 0
    %1778 = vmatprep.mubr.bf16.mxu0 0
    %1779 = vmatmul.mubr.bf16.gmra.mrb[0].mxu0 %v1744
    %v1780 = vpop.f32.mrb[0].mxu0
    %v1781 = vadd.f32 %v1738, %v1780
    %v1782 = vpop.f32.mrb[0].mxu0
    %v1783 = vpop.f32.mrb[0].mxu0
    %v1784 = vpop.f32.mrb[0].mxu0
    %1785 = vdwg.mxu0
    %v1786 = vadd.f32 %v1781, %v1256
    %v1787 = vxor.u32 %v1786, 2147483648
    %v1788 = vmul.f32 %v1787, 1.442695
    %v1789 = vpow.pop %v1788
    %v1790 = vadd.f32 %v1789, 1.0
    %v1791 = vrcp.pop %v1790
    %v1792 = vmul.f32 1.0, %v1791
    %v1793 = vtanh.pop %v1786
    %v1794 = vmul.f32 %v1792, %v1627
    %1796 = vrot.lane.b32.xlu0 %v1793, 64
    %v1797 = vpop.permute.xlu0 %1796
    %v1799 = vmul.f32 %v1792, %v1797
    %1801 = vrot.lane.b32.xlu0 %v1799, 96
    %v1802 = vpop.permute.xlu0 %1801
    %v1804 = vadd.f32 %v1794, %v1802
    %v1805 = vtanh.pop %v1627
    %1807 = vrot.lane.b32.xlu0 %v1792, 64
    %v1808 = vpop.permute.xlu0 %1807
    %v1810 = vmul.f32 %v1805, %v1808
    %1811 = vmatprep.subr.bf16.mxu0 0
    %1812 = vmatpush1.bf16.msra.mxu0 %v1075
    %1813 = vmatprep.subr.bf16.mxu0 0
    %1814 = vmatpush1.bf16.msra.mxu0 %v1076
    %1815 = vmatprep.subr.bf16.mxu0 0
    %1816 = vmatpush1.bf16.msra.mxu0 0
    %1817 = vmatprep.subr.bf16.mxu0 0
    %1818 = vmatpush1.bf16.msra.mxu0 0
    %1819 = vmatprep.subr.bf16.mxu0 0
    %1820 = vmatpush1.bf16.msra.mxu0 0
    %1821 = vmatprep.subr.bf16.mxu0 0
    %1822 = vmatpush1.bf16.msra.mxu0 0
    %1823 = vmatprep.subr.bf16.mxu0 0
    %1824 = vmatpush1.bf16.msra.mxu0 0
    %1825 = vmatprep.subr.bf16.mxu0 0
    %1826 = vmatpush1.bf16.msra.mxu0 0
    %1827 = vmatprep.subr.bf16.mxu0 0
    %1828 = vmatpush1.bf16.msra.mxu0 0
    %1829 = vmatprep.subr.bf16.mxu0 0
    %1830 = vmatpush1.bf16.msra.mxu0 0
    %1831 = vmatprep.subr.bf16.mxu0 0
    %1832 = vmatpush1.bf16.msra.mxu0 0
    %1833 = vmatprep.subr.bf16.mxu0 0
    %1834 = vmatpush1.bf16.msra.mxu0 0
    %1835 = vmatprep.subr.bf16.mxu0 0
    %1836 = vmatpush1.bf16.msra.mxu0 0
    %1837 = vmatprep.subr.bf16.mxu0 0
    %1838 = vmatpush1.bf16.msra.mxu0 0
    %1839 = vmatprep.subr.bf16.mxu0 0
    %1840 = vmatpush1.bf16.msra.mxu0 0
    %1841 = vmatprep.subr.bf16.mxu0 0
    %1842 = vmatpush1.bf16.msra.mxu0 0
    %1843 = vmatprep.mubr.bf16.mxu0 0
    %1844 = vmatmul.mubr.bf16.gmra.mrb[0].mxu0 %v1701
    %v1845 = vpop.f32.mrb[0].mxu0
    %v1846 = vadd.f32 %v1040, %v1845
    %v1847 = vpop.f32.mrb[0].mxu0
    %v1848 = vpop.f32.mrb[0].mxu0
    %v1849 = vpop.f32.mrb[0].mxu0
    %1850 = vdwg.mxu0
    %v1851 = vxor.u32 %v1846, 2147483648
    %v1852 = vmul.f32 %v1851, 1.442695
    %v1853 = vpow.pop %v1852
    %v1854 = vadd.f32 %v1853, 1.0
    %v1855 = vrcp.pop %v1854
    %v1856 = vmul.f32 1.0, %v1855
    %v1857 = vtanh.pop %v1846
    %v1858 = vmul.f32 %v1856, %v1691
    %1860 = vrot.lane.b32.xlu0 %v1857, 64
    %v1861 = vpop.permute.xlu0 %1860
    %v1863 = vmul.f32 %v1856, %v1861
    %1865 = vrot.lane.b32.xlu0 %v1863, 96
    %v1866 = vpop.permute.xlu0 %1865
    %v1868 = vadd.f32 %v1858, %v1866
    %v1869 = vtanh.pop %v1691
    %1871 = vrot.lane.b32.xlu0 %v1856, 64
    %v1872 = vpop.permute.xlu0 %1871
    %v1874 = vmul.f32 %v1869, %v1872
    %v1875 = vpack.c.bf16 %v1810, %v1810
    %v1876 = vpack.c.bf16 %v1874, %v1874
    %v1878 = vsel %vm1079, %v1876, 0
    %1880 = vmatprep.subr.bf16.mxu0 0
    %1881 = vmatpush1.bf16.msra.mxu0 %v1153
    %1882 = vmatprep.subr.bf16.mxu0 0
    %1883 = vmatpush1.bf16.msra.mxu0 %v1154
    %1884 = vmatprep.subr.bf16.mxu0 0
    %1885 = vmatpush1.bf16.msra.mxu0 0
    %1886 = vmatprep.subr.bf16.mxu0 0
    %1887 = vmatpush1.bf16.msra.mxu0 0
    %1888 = vmatprep.subr.bf16.mxu0 0
    %1889 = vmatpush1.bf16.msra.mxu0 0
    %1890 = vmatprep.subr.bf16.mxu0 0
    %1891 = vmatpush1.bf16.msra.mxu0 0
    %1892 = vmatprep.subr.bf16.mxu0 0
    %1893 = vmatpush1.bf16.msra.mxu0 0
    %1894 = vmatprep.subr.bf16.mxu0 0
    %1895 = vmatpush1.bf16.msra.mxu0 0
    %1896 = vmatprep.subr.bf16.mxu0 0
    %1897 = vmatpush1.bf16.msra.mxu0 0
    %1898 = vmatprep.subr.bf16.mxu0 0
    %1899 = vmatpush1.bf16.msra.mxu0 0
    %1900 = vmatprep.subr.bf16.mxu0 0
    %1901 = vmatpush1.bf16.msra.mxu0 0
    %1902 = vmatprep.subr.bf16.mxu0 0
    %1903 = vmatpush1.bf16.msra.mxu0 0
    %1904 = vmatprep.subr.bf16.mxu0 0
    %1905 = vmatpush1.bf16.msra.mxu0 0
    %1906 = vmatprep.subr.bf16.mxu0 0
    %1907 = vmatpush1.bf16.msra.mxu0 0
    %1908 = vmatprep.subr.bf16.mxu0 0
    %1909 = vmatpush1.bf16.msra.mxu0 0
    %1910 = vmatprep.subr.bf16.mxu0 0
    %1911 = vmatpush1.bf16.msra.mxu0 0
    %1912 = vmatprep.mubr.bf16.mxu0 0
    %1913 = vmatmul.mubr.bf16.gmra.mrb[0].mxu0 %v1878
    %v1914 = vpop.f32.mrb[0].mxu0
    %v1915 = vadd.f32 0.0, %v1914
    %v1916 = vpop.f32.mrb[0].mxu0
    %v1917 = vpop.f32.mrb[0].mxu0
    %v1918 = vpop.f32.mrb[0].mxu0
    %1919 = vdwg.mxu0
    %v1921 = vsel %vm1079, %v1875, 0
    %1923 = vmatprep.subr.bf16.mxu0 0
    %1924 = vmatpush1.bf16.msra.mxu0 %v1208
    %1925 = vmatprep.subr.bf16.mxu0 0
    %1926 = vmatpush1.bf16.msra.mxu0 %v1209
    %1927 = vmatprep.subr.bf16.mxu0 0
    %1928 = vmatpush1.bf16.msra.mxu0 0
    %1929 = vmatprep.subr.bf16.mxu0 0
    %1930 = vmatpush1.bf16.msra.mxu0 0
    %1931 = vmatprep.subr.bf16.mxu0 0
    %1932 = vmatpush1.bf16.msra.mxu0 0
    %1933 = vmatprep.subr.bf16.mxu0 0
    %1934 = vmatpush1.bf16.msra.mxu0 0
    %1935 = vmatprep.subr.bf16.mxu0 0
    %1936 = vmatpush1.bf16.msra.mxu0 0
    %1937 = vmatprep.subr.bf16.mxu0 0
    %1938 = vmatpush1.bf16.msra.mxu0 0
    %1939 = vmatprep.subr.bf16.mxu0 0
    %1940 = vmatpush1.bf16.msra.mxu0 0
    %1941 = vmatprep.subr.bf16.mxu0 0
    %1942 = vmatpush1.bf16.msra.mxu0 0
    %1943 = vmatprep.subr.bf16.mxu0 0
    %1944 = vmatpush1.bf16.msra.mxu0 0
    %1945 = vmatprep.subr.bf16.mxu0 0
    %1946 = vmatpush1.bf16.msra.mxu0 0
    %1947 = vmatprep.subr.bf16.mxu0 0
    %1948 = vmatpush1.bf16.msra.mxu0 0
    %1949 = vmatprep.subr.bf16.mxu0 0
    %1950 = vmatpush1.bf16.msra.mxu0 0
    %1951 = vmatprep.subr.bf16.mxu0 0
    %1952 = vmatpush1.bf16.msra.mxu0 0
    %1953 = vmatprep.subr.bf16.mxu0 0
    %1954 = vmatpush1.bf16.msra.mxu0 0
    %1955 = vmatprep.mubr.bf16.mxu0 0
    %1956 = vmatmul.mubr.bf16.gmra.mrb[0].mxu0 %v1921
    %v1957 = vpop.f32.mrb[0].mxu0
    %v1958 = vadd.f32 %v1915, %v1957
    %v1959 = vpop.f32.mrb[0].mxu0
    %v1960 = vpop.f32.mrb[0].mxu0
    %v1961 = vpop.f32.mrb[0].mxu0
    %1962 = vdwg.mxu0
    %v1963 = vadd.f32 %v1958, %v1256
    %v1964 = vxor.u32 %v1963, 2147483648
    %v1965 = vmul.f32 %v1964, 1.442695
    %v1966 = vpow.pop %v1965
    %v1967 = vadd.f32 %v1966, 1.0
    %v1968 = vrcp.pop %v1967
    %v1969 = vmul.f32 1.0, %v1968
    %v1970 = vtanh.pop %v1963
    %v1971 = vmul.f32 %v1969, %v1804
    %1973 = vrot.lane.b32.xlu0 %v1970, 64
    %v1974 = vpop.permute.xlu0 %1973
    %v1976 = vmul.f32 %v1969, %v1974
    %1978 = vrot.lane.b32.xlu0 %v1976, 96
    %v1979 = vpop.permute.xlu0 %1978
    %v1981 = vadd.f32 %v1971, %v1979
    %v1982 = vtanh.pop %v1804
    %1984 = vrot.lane.b32.xlu0 %v1969, 64
    %v1985 = vpop.permute.xlu0 %1984
    %v1987 = vmul.f32 %v1982, %v1985
    %1988 = vmatprep.subr.bf16.mxu0 0
    %1989 = vmatpush1.bf16.msra.mxu0 %v1075
    %1990 = vmatprep.subr.bf16.mxu0 0
    %1991 = vmatpush1.bf16.msra.mxu0 %v1076
    %1992 = vmatprep.subr.bf16.mxu0 0
    %1993 = vmatpush1.bf16.msra.mxu0 0
    %1994 = vmatprep.subr.bf16.mxu0 0
    %1995 = vmatpush1.bf16.msra.mxu0 0
    %1996 = vmatprep.subr.bf16.mxu0 0
    %1997 = vmatpush1.bf16.msra.mxu0 0
    %1998 = vmatprep.subr.bf16.mxu0 0
    %1999 = vmatpush1.bf16.msra.mxu0 0
    %2000 = vmatprep.subr.bf16.mxu0 0
    %2001 = vmatpush1.bf16.msra.mxu0 0
    %2002 = vmatprep.subr.bf16.mxu0 0
    %2003 = vmatpush1.bf16.msra.mxu0 0
    %2004 = vmatprep.subr.bf16.mxu0 0
    %2005 = vmatpush1.bf16.msra.mxu0 0
    %2006 = vmatprep.subr.bf16.mxu0 0
    %2007 = vmatpush1.bf16.msra.mxu0 0
    %2008 = vmatprep.subr.bf16.mxu0 0
    %2009 = vmatpush1.bf16.msra.mxu0 0
    %2010 = vmatprep.subr.bf16.mxu0 0
    %2011 = vmatpush1.bf16.msra.mxu0 0
    %2012 = vmatprep.subr.bf16.mxu0 0
    %2013 = vmatpush1.bf16.msra.mxu0 0
    %2014 = vmatprep.subr.bf16.mxu0 0
    %2015 = vmatpush1.bf16.msra.mxu0 0
    %2016 = vmatprep.subr.bf16.mxu0 0
    %2017 = vmatpush1.bf16.msra.mxu0 0
    %2018 = vmatprep.subr.bf16.mxu0 0
    %2019 = vmatpush1.bf16.msra.mxu0 0
    %2020 = vmatprep.mubr.bf16.mxu0 0
    %2021 = vmatmul.mubr.bf16.gmra.mrb[0].mxu0 %v1878
    %v2022 = vpop.f32.mrb[0].mxu0
    %v2023 = vadd.f32 %v1043, %v2022
    %v2024 = vpop.f32.mrb[0].mxu0
    %v2025 = vpop.f32.mrb[0].mxu0
    %v2026 = vpop.f32.mrb[0].mxu0
    %2027 = vdwg.mxu0
    %v2028 = vxor.u32 %v2023, 2147483648
    %v2029 = vmul.f32 %v2028, 1.442695
    %v2030 = vpow.pop %v2029
    %v2031 = vadd.f32 %v2030, 1.0
    %v2032 = vrcp.pop %v2031
    %v2033 = vmul.f32 1.0, %v2032
    %v2034 = vtanh.pop %v2023
    %v2035 = vmul.f32 %v2033, %v1868
    %2037 = vrot.lane.b32.xlu0 %v2034, 64
    %v2038 = vpop.permute.xlu0 %2037
    %v2040 = vmul.f32 %v2033, %v2038
    %2042 = vrot.lane.b32.xlu0 %v2040, 96
    %v2043 = vpop.permute.xlu0 %2042
    %v2045 = vadd.f32 %v2035, %v2043
    %v2046 = vtanh.pop %v1868
    %2048 = vrot.lane.b32.xlu0 %v2033, 64
    %v2049 = vpop.permute.xlu0 %2048
    %v2051 = vmul.f32 %v2046, %v2049
    %v2052 = vpack.c.bf16 %v1987, %v1987
    %v2053 = vpack.c.bf16 %v2051, %v2051
    %v2055 = vsel %vm1079, %v2053, 0
    %2057 = vmatprep.subr.bf16.mxu0 0
    %2058 = vmatpush1.bf16.msra.mxu0 %v1153
    %2059 = vmatprep.subr.bf16.mxu0 0
    %2060 = vmatpush1.bf16.msra.mxu0 %v1154
    %2061 = vmatprep.subr.bf16.mxu0 0
    %2062 = vmatpush1.bf16.msra.mxu0 0
    %2063 = vmatprep.subr.bf16.mxu0 0
    %2064 = vmatpush1.bf16.msra.mxu0 0
    %2065 = vmatprep.subr.bf16.mxu0 0
    %2066 = vmatpush1.bf16.msra.mxu0 0
    %2067 = vmatprep.subr.bf16.mxu0 0
    %2068 = vmatpush1.bf16.msra.mxu0 0
    %2069 = vmatprep.subr.bf16.mxu0 0
    %2070 = vmatpush1.bf16.msra.mxu0 0
    %2071 = vmatprep.subr.bf16.mxu0 0
    %2072 = vmatpush1.bf16.msra.mxu0 0
    %2073 = vmatprep.subr.bf16.mxu0 0
    %2074 = vmatpush1.bf16.msra.mxu0 0
    %2075 = vmatprep.subr.bf16.mxu0 0
    %2076 = vmatpush1.bf16.msra.mxu0 0
    %2077 = vmatprep.subr.bf16.mxu0 0
    %2078 = vmatpush1.bf16.msra.mxu0 0
    %2079 = vmatprep.subr.bf16.mxu0 0
    %2080 = vmatpush1.bf16.msra.mxu0 0
    %2081 = vmatprep.subr.bf16.mxu0 0
    %2082 = vmatpush1.bf16.msra.mxu0 0
    %2083 = vmatprep.subr.bf16.mxu0 0
    %2084 = vmatpush1.bf16.msra.mxu0 0
    %2085 = vmatprep.subr.bf16.mxu0 0
    %2086 = vmatpush1.bf16.msra.mxu0 0
    %2087 = vmatprep.subr.bf16.mxu0 0
    %2088 = vmatpush1.bf16.msra.mxu0 0
    %2089 = vmatprep.mubr.bf16.mxu0 0
    %2090 = vmatmul.mubr.bf16.gmra.mrb[0].mxu0 %v2055
    %v2091 = vpop.f32.mrb[0].mxu0
    %v2092 = vadd.f32 0.0, %v2091
    %v2093 = vpop.f32.mrb[0].mxu0
    %v2094 = vpop.f32.mrb[0].mxu0
    %v2095 = vpop.f32.mrb[0].mxu0
    %2096 = vdwg.mxu0
    %v2098 = vsel %vm1079, %v2052, 0
    %2100 = vmatprep.subr.bf16.mxu0 0
    %2101 = vmatpush1.bf16.msra.mxu0 %v1208
    %2102 = vmatprep.subr.bf16.mxu0 0
    %2103 = vmatpush1.bf16.msra.mxu0 %v1209
    %2104 = vmatprep.subr.bf16.mxu0 0
    %2105 = vmatpush1.bf16.msra.mxu0 0
    %2106 = vmatprep.subr.bf16.mxu0 0
    %2107 = vmatpush1.bf16.msra.mxu0 0
    %2108 = vmatprep.subr.bf16.mxu0 0
    %2109 = vmatpush1.bf16.msra.mxu0 0
    %2110 = vmatprep.subr.bf16.mxu0 0
    %2111 = vmatpush1.bf16.msra.mxu0 0
    %2112 = vmatprep.subr.bf16.mxu0 0
    %2113 = vmatpush1.bf16.msra.mxu0 0
    %2114 = vmatprep.subr.bf16.mxu0 0
    %2115 = vmatpush1.bf16.msra.mxu0 0
    %2116 = vmatprep.subr.bf16.mxu0 0
    %2117 = vmatpush1.bf16.msra.mxu0 0
    %2118 = vmatprep.subr.bf16.mxu0 0
    %2119 = vmatpush1.bf16.msra.mxu0 0
    %2120 = vmatprep.subr.bf16.mxu0 0
    %2121 = vmatpush1.bf16.msra.mxu0 0
    %2122 = vmatprep.subr.bf16.mxu0 0
    %2123 = vmatpush1.bf16.msra.mxu0 0
    %2124 = vmatprep.subr.bf16.mxu0 0
    %2125 = vmatpush1.bf16.msra.mxu0 0
    %2126 = vmatprep.subr.bf16.mxu0 0
    %2127 = vmatpush1.bf16.msra.mxu0 0
    %2128 = vmatprep.subr.bf16.mxu0 0
    %2129 = vmatpush1.bf16.msra.mxu0 0
    %2130 = vmatprep.subr.bf16.mxu0 0
    %2131 = vmatpush1.bf16.msra.mxu0 0
    %2132 = vmatprep.mubr.bf16.mxu0 0
    %2133 = vmatmul.mubr.bf16.gmra.mrb[0].mxu0 %v2098
    %v2134 = vpop.f32.mrb[0].mxu0
    %v2135 = vadd.f32 %v2092, %v2134
    %v2136 = vpop.f32.mrb[0].mxu0
    %v2137 = vpop.f32.mrb[0].mxu0
    %v2138 = vpop.f32.mrb[0].mxu0
    %2139 = vdwg.mxu0
    %v2140 = vadd.f32 %v2135, %v1256
    %v2141 = vxor.u32 %v2140, 2147483648
    %v2142 = vmul.f32 %v2141, 1.442695
    %v2143 = vpow.pop %v2142
    %v2144 = vadd.f32 %v2143, 1.0
    %v2145 = vrcp.pop %v2144
    %v2146 = vmul.f32 1.0, %v2145
    %v2147 = vtanh.pop %v2140
    %v2148 = vmul.f32 %v2146, %v1981
    %2150 = vrot.lane.b32.xlu0 %v2147, 64
    %v2151 = vpop.permute.xlu0 %2150
    %v2153 = vmul.f32 %v2146, %v2151
    %2155 = vrot.lane.b32.xlu0 %v2153, 96
    %v2156 = vpop.permute.xlu0 %2155
    %v2158 = vadd.f32 %v2148, %v2156
    %v2159 = vtanh.pop %v1981
    %2161 = vrot.lane.b32.xlu0 %v2146, 64
    %v2162 = vpop.permute.xlu0 %2161
    %v2164 = vmul.f32 %v2159, %v2162
    %2165 = vmatprep.subr.bf16.mxu0 0
    %2166 = vmatpush1.bf16.msra.mxu0 %v1075
    %2167 = vmatprep.subr.bf16.mxu0 0
    %2168 = vmatpush1.bf16.msra.mxu0 %v1076
    %2169 = vmatprep.subr.bf16.mxu0 0
    %2170 = vmatpush1.bf16.msra.mxu0 0
    %2171 = vmatprep.subr.bf16.mxu0 0
    %2172 = vmatpush1.bf16.msra.mxu0 0
    %2173 = vmatprep.subr.bf16.mxu0 0
    %2174 = vmatpush1.bf16.msra.mxu0 0
    %2175 = vmatprep.subr.bf16.mxu0 0
    %2176 = vmatpush1.bf16.msra.mxu0 0
    %2177 = vmatprep.subr.bf16.mxu0 0
    %2178 = vmatpush1.bf16.msra.mxu0 0
    %2179 = vmatprep.subr.bf16.mxu0 0
    %2180 = vmatpush1.bf16.msra.mxu0 0
    %2181 = vmatprep.subr.bf16.mxu0 0
    %2182 = vmatpush1.bf16.msra.mxu0 0
    %2183 = vmatprep.subr.bf16.mxu0 0
    %2184 = vmatpush1.bf16.msra.mxu0 0
    %2185 = vmatprep.subr.bf16.mxu0 0
    %2186 = vmatpush1.bf16.msra.mxu0 0
    %2187 = vmatprep.subr.bf16.mxu0 0
    %2188 = vmatpush1.bf16.msra.mxu0 0
    %2189 = vmatprep.subr.bf16.mxu0 0
    %2190 = vmatpush1.bf16.msra.mxu0 0
    %2191 = vmatprep.subr.bf16.mxu0 0
    %2192 = vmatpush1.bf16.msra.mxu0 0
    %2193 = vmatprep.subr.bf16.mxu0 0
    %2194 = vmatpush1.bf16.msra.mxu0 0
    %2195 = vmatprep.subr.bf16.mxu0 0
    %2196 = vmatpush1.bf16.msra.mxu0 0
    %2197 = vmatprep.mubr.bf16.mxu0 0
    %2198 = vmatmul.mubr.bf16.gmra.mrb[0].mxu0 %v2055
    %v2199 = vpop.f32.mrb[0].mxu0
    %v2200 = vadd.f32 %v1048, %v2199
    %v2201 = vpop.f32.mrb[0].mxu0
    %v2202 = vpop.f32.mrb[0].mxu0
    %v2203 = vpop.f32.mrb[0].mxu0
    %2204 = vdwg.mxu0
    %v2205 = vxor.u32 %v2200, 2147483648
    %v2206 = vmul.f32 %v2205, 1.442695
    %v2207 = vpow.pop %v2206
    %v2208 = vadd.f32 %v2207, 1.0
    %v2209 = vrcp.pop %v2208
    %v2210 = vmul.f32 1.0, %v2209
    %v2211 = vtanh.pop %v2200
    %v2212 = vmul.f32 %v2210, %v2045
    %2214 = vrot.lane.b32.xlu0 %v2211, 64
    %v2215 = vpop.permute.xlu0 %2214
    %v2217 = vmul.f32 %v2210, %v2215
    %2219 = vrot.lane.b32.xlu0 %v2217, 96
    %v2220 = vpop.permute.xlu0 %2219
    %v2222 = vadd.f32 %v2212, %v2220
    %v2223 = vtanh.pop %v2045
    %2225 = vrot.lane.b32.xlu0 %v2210, 64
    %v2226 = vpop.permute.xlu0 %2225
    %v2228 = vmul.f32 %v2223, %v2226
    %v2229 = vpack.c.bf16 %v2164, %v2164
    %v2230 = vpack.c.bf16 %v2228, %v2228
    %v2232 = vsel %vm1079, %v2230, 0
    %2234 = vmatprep.subr.bf16.mxu0 0
    %2235 = vmatpush1.bf16.msra.mxu0 %v1153
    %2236 = vmatprep.subr.bf16.mxu0 0
    %2237 = vmatpush1.bf16.msra.mxu0 %v1154
    %2238 = vmatprep.subr.bf16.mxu0 0
    %2239 = vmatpush1.bf16.msra.mxu0 0
    %2240 = vmatprep.subr.bf16.mxu0 0
    %2241 = vmatpush1.bf16.msra.mxu0 0
    %2242 = vmatprep.subr.bf16.mxu0 0
    %2243 = vmatpush1.bf16.msra.mxu0 0
    %2244 = vmatprep.subr.bf16.mxu0 0
    %2245 = vmatpush1.bf16.msra.mxu0 0
    %2246 = vmatprep.subr.bf16.mxu0 0
    %2247 = vmatpush1.bf16.msra.mxu0 0
    %2248 = vmatprep.subr.bf16.mxu0 0
    %2249 = vmatpush1.bf16.msra.mxu0 0
    %2250 = vmatprep.subr.bf16.mxu0 0
    %2251 = vmatpush1.bf16.msra.mxu0 0
    %2252 = vmatprep.subr.bf16.mxu0 0
    %2253 = vmatpush1.bf16.msra.mxu0 0
    %2254 = vmatprep.subr.bf16.mxu0 0
    %2255 = vmatpush1.bf16.msra.mxu0 0
    %2256 = vmatprep.subr.bf16.mxu0 0
    %2257 = vmatpush1.bf16.msra.mxu0 0
    %2258 = vmatprep.subr.bf16.mxu0 0
    %2259 = vmatpush1.bf16.msra.mxu0 0
    %2260 = vmatprep.subr.bf16.mxu0 0
    %2261 = vmatpush1.bf16.msra.mxu0 0
    %2262 = vmatprep.subr.bf16.mxu0 0
    %2263 = vmatpush1.bf16.msra.mxu0 0
    %2264 = vmatprep.subr.bf16.mxu0 0
    %2265 = vmatpush1.bf16.msra.mxu0 0
    %2266 = vmatprep.mubr.bf16.mxu0 0
    %2267 = vmatmul.mubr.bf16.gmra.mrb[0].mxu0 %v2232
    %v2268 = vpop.f32.mrb[0].mxu0
    %v2269 = vadd.f32 0.0, %v2268
    %v2270 = vpop.f32.mrb[0].mxu0
    %v2271 = vpop.f32.mrb[0].mxu0
    %v2272 = vpop.f32.mrb[0].mxu0
    %2273 = vdwg.mxu0
    %v2275 = vsel %vm1079, %v2229, 0
    %2277 = vmatprep.subr.bf16.mxu0 0
    %2278 = vmatpush1.bf16.msra.mxu0 %v1208
    %2279 = vmatprep.subr.bf16.mxu0 0
    %2280 = vmatpush1.bf16.msra.mxu0 %v1209
    %2281 = vmatprep.subr.bf16.mxu0 0
    %2282 = vmatpush1.bf16.msra.mxu0 0
    %2283 = vmatprep.subr.bf16.mxu0 0
    %2284 = vmatpush1.bf16.msra.mxu0 0
    %2285 = vmatprep.subr.bf16.mxu0 0
    %2286 = vmatpush1.bf16.msra.mxu0 0
    %2287 = vmatprep.subr.bf16.mxu0 0
    %2288 = vmatpush1.bf16.msra.mxu0 0
    %2289 = vmatprep.subr.bf16.mxu0 0
    %2290 = vmatpush1.bf16.msra.mxu0 0
    %2291 = vmatprep.subr.bf16.mxu0 0
    %2292 = vmatpush1.bf16.msra.mxu0 0
    %2293 = vmatprep.subr.bf16.mxu0 0
    %2294 = vmatpush1.bf16.msra.mxu0 0
    %2295 = vmatprep.subr.bf16.mxu0 0
    %2296 = vmatpush1.bf16.msra.mxu0 0
    %2297 = vmatprep.subr.bf16.mxu0 0
    %2298 = vmatpush1.bf16.msra.mxu0 0
    %2299 = vmatprep.subr.bf16.mxu0 0
    %2300 = vmatpush1.bf16.msra.mxu0 0
    %2301 = vmatprep.subr.bf16.mxu0 0
    %2302 = vmatpush1.bf16.msra.mxu0 0
    %2303 = vmatprep.subr.bf16.mxu0 0
    %2304 = vmatpush1.bf16.msra.mxu0 0
    %2305 = vmatprep.subr.bf16.mxu0 0
    %2306 = vmatpush1.bf16.msra.mxu0 0
    %2307 = vmatprep.subr.bf16.mxu0 0
    %2308 = vmatpush1.bf16.msra.mxu0 0
    %2309 = vmatprep.mubr.bf16.mxu0 0
    %2310 = vmatmul.mubr.bf16.gmra.mrb[0].mxu0 %v2275
    %v2311 = vpop.f32.mrb[0].mxu0
    %v2312 = vadd.f32 %v2269, %v2311
    %v2313 = vpop.f32.mrb[0].mxu0
    %v2314 = vpop.f32.mrb[0].mxu0
    %v2315 = vpop.f32.mrb[0].mxu0
    %2316 = vdwg.mxu0
    %v2317 = vadd.f32 %v2312, %v1256
    %v2318 = vxor.u32 %v2317, 2147483648
    %v2319 = vmul.f32 %v2318, 1.442695
    %v2320 = vpow.pop %v2319
    %v2321 = vadd.f32 %v2320, 1.0
    %v2322 = vrcp.pop %v2321
    %v2323 = vmul.f32 1.0, %v2322
    %v2324 = vtanh.pop %v2317
    %v2325 = vmul.f32 %v2323, %v2158
    %2327 = vrot.lane.b32.xlu0 %v2324, 64
    %v2328 = vpop.permute.xlu0 %2327
    %v2330 = vmul.f32 %v2323, %v2328
    %2332 = vrot.lane.b32.xlu0 %v2330, 96
    %v2333 = vpop.permute.xlu0 %2332
    %v2335 = vadd.f32 %v2325, %v2333
    %v2336 = vtanh.pop %v2158
    %2338 = vrot.lane.b32.xlu0 %v2323, 64
    %v2339 = vpop.permute.xlu0 %2338
    %v2341 = vmul.f32 %v2336, %v2339
    %2342 = vmatprep.subr.bf16.mxu0 0
    %2343 = vmatpush1.bf16.msra.mxu0 %v1075
    %2344 = vmatprep.subr.bf16.mxu0 0
    %2345 = vmatpush1.bf16.msra.mxu0 %v1076
    %2346 = vmatprep.subr.bf16.mxu0 0
    %2347 = vmatpush1.bf16.msra.mxu0 0
    %2348 = vmatprep.subr.bf16.mxu0 0
    %2349 = vmatpush1.bf16.msra.mxu0 0
    %2350 = vmatprep.subr.bf16.mxu0 0
    %2351 = vmatpush1.bf16.msra.mxu0 0
    %2352 = vmatprep.subr.bf16.mxu0 0
    %2353 = vmatpush1.bf16.msra.mxu0 0
    %2354 = vmatprep.subr.bf16.mxu0 0
    %2355 = vmatpush1.bf16.msra.mxu0 0
    %2356 = vmatprep.subr.bf16.mxu0 0
    %2357 = vmatpush1.bf16.msra.mxu0 0
    %2358 = vmatprep.subr.bf16.mxu0 0
    %2359 = vmatpush1.bf16.msra.mxu0 0
    %2360 = vmatprep.subr.bf16.mxu0 0
    %2361 = vmatpush1.bf16.msra.mxu0 0
    %2362 = vmatprep.subr.bf16.mxu0 0
    %2363 = vmatpush1.bf16.msra.mxu0 0
    %2364 = vmatprep.subr.bf16.mxu0 0
    %2365 = vmatpush1.bf16.msra.mxu0 0
    %2366 = vmatprep.subr.bf16.mxu0 0
    %2367 = vmatpush1.bf16.msra.mxu0 0
    %2368 = vmatprep.subr.bf16.mxu0 0
    %2369 = vmatpush1.bf16.msra.mxu0 0
    %2370 = vmatprep.subr.bf16.mxu0 0
    %2371 = vmatpush1.bf16.msra.mxu0 0
    %2372 = vmatprep.subr.bf16.mxu0 0
    %2373 = vmatpush1.bf16.msra.mxu0 0
    %2374 = vmatprep.mubr.bf16.mxu0 0
    %2375 = vmatmul.mubr.bf16.gmra.mrb[0].mxu0 %v2232
    %v2376 = vpop.f32.mrb[0].mxu0
    %v2377 = vadd.f32 %v1051, %v2376
    %v2378 = vpop.f32.mrb[0].mxu0
    %v2379 = vpop.f32.mrb[0].mxu0
    %v2380 = vpop.f32.mrb[0].mxu0
    %2381 = vdwg.mxu0
    %v2382 = vxor.u32 %v2377, 2147483648
    %v2383 = vmul.f32 %v2382, 1.442695
    %v2384 = vpow.pop %v2383
    %v2385 = vadd.f32 %v2384, 1.0
    %v2386 = vrcp.pop %v2385
    %v2387 = vmul.f32 1.0, %v2386
    %v2388 = vtanh.pop %v2222
    %2390 = vrot.lane.b32.xlu0 %v2387, 64
    %v2391 = vpop.permute.xlu0 %2390
    %v2393 = vmul.f32 %v2388, %v2391
    %v2394 = vpack.c.bf16 %v2341, %v2341
    %v2395 = vpack.c.bf16 %v2393, %v2393
    %v2397 = vsel %vm1079, %v2395, 0
    %2399 = vmatprep.subr.bf16.mxu0 0
    %2400 = vmatpush1.bf16.msra.mxu0 %v1153
    %2401 = vmatprep.subr.bf16.mxu0 0
    %2402 = vmatpush1.bf16.msra.mxu0 %v1154
    %2403 = vmatprep.subr.bf16.mxu0 0
    %2404 = vmatpush1.bf16.msra.mxu0 0
    %2405 = vmatprep.subr.bf16.mxu0 0
    %2406 = vmatpush1.bf16.msra.mxu0 0
    %2407 = vmatprep.subr.bf16.mxu0 0
    %2408 = vmatpush1.bf16.msra.mxu0 0
    %2409 = vmatprep.subr.bf16.mxu0 0
    %2410 = vmatpush1.bf16.msra.mxu0 0
    %2411 = vmatprep.subr.bf16.mxu0 0
    %2412 = vmatpush1.bf16.msra.mxu0 0
    %2413 = vmatprep.subr.bf16.mxu0 0
    %2414 = vmatpush1.bf16.msra.mxu0 0
    %2415 = vmatprep.subr.bf16.mxu0 0
    %2416 = vmatpush1.bf16.msra.mxu0 0
    %2417 = vmatprep.subr.bf16.mxu0 0
    %2418 = vmatpush1.bf16.msra.mxu0 0
    %2419 = vmatprep.subr.bf16.mxu0 0
    %2420 = vmatpush1.bf16.msra.mxu0 0
    %2421 = vmatprep.subr.bf16.mxu0 0
    %2422 = vmatpush1.bf16.msra.mxu0 0
    %2423 = vmatprep.subr.bf16.mxu0 0
    %2424 = vmatpush1.bf16.msra.mxu0 0
    %2425 = vmatprep.subr.bf16.mxu0 0
    %2426 = vmatpush1.bf16.msra.mxu0 0
    %2427 = vmatprep.subr.bf16.mxu0 0
    %2428 = vmatpush1.bf16.msra.mxu0 0
    %2429 = vmatprep.subr.bf16.mxu0 0
    %2430 = vmatpush1.bf16.msra.mxu0 0
    %2431 = vmatprep.mubr.bf16.mxu0 0
    %2432 = vmatmul.mubr.bf16.gmra.mrb[0].mxu0 %v2397
    %v2433 = vpop.f32.mrb[0].mxu0
    %v2434 = vadd.f32 0.0, %v2433
    %v2435 = vpop.f32.mrb[0].mxu0
    %v2436 = vpop.f32.mrb[0].mxu0
    %v2437 = vpop.f32.mrb[0].mxu0
    %2438 = vdwg.mxu0
    %v2440 = vsel %vm1079, %v2394, 0
    %2442 = vmatprep.subr.bf16.mxu0 0
    %2443 = vmatpush1.bf16.msra.mxu0 %v1208
    %2444 = vmatprep.subr.bf16.mxu0 0
    %2445 = vmatpush1.bf16.msra.mxu0 %v1209
    %2446 = vmatprep.subr.bf16.mxu0 0
    %2447 = vmatpush1.bf16.msra.mxu0 0
    %2448 = vmatprep.subr.bf16.mxu0 0
    %2449 = vmatpush1.bf16.msra.mxu0 0
    %2450 = vmatprep.subr.bf16.mxu0 0
    %2451 = vmatpush1.bf16.msra.mxu0 0
    %2452 = vmatprep.subr.bf16.mxu0 0
    %2453 = vmatpush1.bf16.msra.mxu0 0
    %2454 = vmatprep.subr.bf16.mxu0 0
    %2455 = vmatpush1.bf16.msra.mxu0 0
    %2456 = vmatprep.subr.bf16.mxu0 0
    %2457 = vmatpush1.bf16.msra.mxu0 0
    %2458 = vmatprep.subr.bf16.mxu0 0
    %2459 = vmatpush1.bf16.msra.mxu0 0
    %2460 = vmatprep.subr.bf16.mxu0 0
    %2461 = vmatpush1.bf16.msra.mxu0 0
    %2462 = vmatprep.subr.bf16.mxu0 0
    %2463 = vmatpush1.bf16.msra.mxu0 0
    %2464 = vmatprep.subr.bf16.mxu0 0
    %2465 = vmatpush1.bf16.msra.mxu0 0
    %2466 = vmatprep.subr.bf16.mxu0 0
    %2467 = vmatpush1.bf16.msra.mxu0 0
    %2468 = vmatprep.subr.bf16.mxu0 0
    %2469 = vmatpush1.bf16.msra.mxu0 0
    %2470 = vmatprep.subr.bf16.mxu0 0
    %2471 = vmatpush1.bf16.msra.mxu0 0
    %2472 = vmatprep.subr.bf16.mxu0 0
    %2473 = vmatpush1.bf16.msra.mxu0 0
    %2474 = vmatprep.mubr.bf16.mxu0 0
    %2475 = vmatmul.mubr.bf16.gmra.mrb[0].mxu0 %v2440
    %v2476 = vpop.f32.mrb[0].mxu0
    %v2477 = vadd.f32 %v2434, %v2476
    %v2478 = vpop.f32.mrb[0].mxu0
    %v2479 = vpop.f32.mrb[0].mxu0
    %v2480 = vpop.f32.mrb[0].mxu0
    %2481 = vdwg.mxu0
    %v2482 = vadd.f32 %v2477, %v1256
    %v2483 = vxor.u32 %v2482, 2147483648
    %v2484 = vmul.f32 %v2483, 1.442695
    %v2485 = vpow.pop %v2484
    %v2486 = vadd.f32 %v2485, 1.0
    %v2487 = vrcp.pop %v2486
    %v2488 = vmul.f32 1.0, %v2487
    %v2489 = vtanh.pop %v2335
    %2491 = vrot.lane.b32.xlu0 %v2488, 64
    %v2492 = vpop.permute.xlu0 %2491
    %v2494 = vmul.f32 %v2489, %v2492
    %2495 = vst.msk [vmem:[#allocation10] sm:$0xff] %vm1079, %v2494
    // Predicated region
    $region46: #{tpu_custom_call.1} parent=1 // pred_check
      _
    $region47: #{tpu_custom_call.1} parent=1 // pred_check_branch
      %2497 = sbr.rel (0) target = $region49
    $region48: #{tpu_custom_call.1} parent=1 // pred_region
      %s2499 = ssub.s32 128, 128
      %2500 = vsyncadd [#allocation4], %s2499
      %s2502 = sshll.u32 [#allocation10], 4
      %s2503 = int_to_ptr.vmem [resolvable:$true] %s2502
      %2505 = dma.vmem_to_hbm [thread:$0]  %s2503, 128, %s7, [#allocation4]
    $region49: #{tpu_custom_call.1} parent=1 // pred_fallthru
      _
    // Predicated region
    $region50: #{tpu_custom_call.1} parent=1 // pred_check
      _
    $region51: #{tpu_custom_call.1} parent=1 // pred_check_branch
      %2507 = sbr.rel (0) target = $region53
    $region52: #{tpu_custom_call.1} parent=1 // pred_region
      %2508 = dma.done [#allocation4], 128
    $region53: #{tpu_custom_call.1} parent=1 // pred_fallthru
      _
    %2509 = vsyncpa [#allocation3], 1
    %2510 = vsyncpa [#allocation6], 1
    %2511 = vsyncpa [#allocation9], 1
    %2512 = vsyncpa [#allocation4], 1

</llo_original>
